<compile_context>
chip_gen: v5e
topology: v5e:2x2
jax: 0.10.0
libtpu: 0.0.40
codegen_flags: <defaults>
</compile_context>

<pallas_src>
import math

import jax
import jax.numpy as jnp
from jax.experimental import pallas as pl
from jax.experimental.pallas import tpu as pltpu


# ----------------------------------------------------------------------------
# Pallas kernel: one LSTM layer, both directions fused, time-chunked.
# ----------------------------------------------------------------------------
def _fused_lstm_layer_kernel(x_ref, w_ih_ref, w_hh_ref, b_ref, h0_ref, c0_ref,
                             y_ref, hn_ref, cn_ref,
                             h_scr, c_scr, gx_scr):
    d = pl.program_id(0)              # direction (0 = fwd, 1 = bwd)
    tc = pl.program_id(1)             # time chunk
    n_chunks = pl.num_programs(1)

    P = x_ref.shape[0]                # number of input "parts"
    T = y_ref.shape[1]                # timesteps per chunk (static)
    H = y_ref.shape[3]
    batch = y_ref.shape[2]
    f32 = jnp.float32

    # ---- Hoisted input projection for the whole chunk: (T*batch, 4H). ------
    acc = None
    for p in range(P):                                    # static, P in {1, 2}
        m = jnp.dot(x_ref[p].astype(f32), w_ih_ref[0, p].astype(f32),
                    preferred_element_type=f32)
        acc = m if acc is None else acc + m
    gx = acc + b_ref[0].astype(f32)                       # (T*batch, 4H)

    # Stage per-step gate inputs as (T, batch, 4H) for cheap dynamic indexing.
    for t in range(T):                                    # static unroll
        gx_scr[t] = gx[t * batch:(t + 1) * batch, :]

    # ---- Initialize carried state at this direction's first chunk. ---------
    @pl.when(tc == 0)
    def _():
        h_scr[d] = h0_ref[0].astype(f32)
        c_scr[d] = c0_ref[0].astype(f32)

    w_hh = w_hh_ref[0].astype(f32)                        # (H, 4H), resident

    # ---- Serial recurrence over the chunk's timesteps. ----------------------
    def step(s, carry):
        h, c_prev = carry
        # Forward direction walks the chunk in order, backward in reverse.
        t_eff = jnp.where(d == 0, s, T - 1 - s)
        gates = gx_scr[t_eff] + jnp.dot(h, w_hh, preferred_element_type=f32)
        i_g = jax.nn.sigmoid(gates[:, 0 * H:1 * H])
        f_g = jax.nn.sigmoid(gates[:, 1 * H:2 * H])
        g_g = jnp.tanh(gates[:, 2 * H:3 * H])
        o_g = jax.nn.sigmoid(gates[:, 3 * H:4 * H])
        c_new = f_g * c_prev + i_g * g_g
        h_new = o_g * jnp.tanh(c_new)
        y_ref[0, t_eff] = h_new.astype(y_ref.dtype)
        return (h_new, c_new)

    h_fin, c_fin = jax.lax.fori_loop(0, T, step, (h_scr[d], c_scr[d]),
                                     unroll=True)

    h_scr[d] = h_fin
    c_scr[d] = c_fin

    # ---- Final states: written once, on this direction's last chunk. --------
    @pl.when(tc == n_chunks - 1)
    def _():
        hn_ref[0] = h_fin.astype(hn_ref.dtype)
        cn_ref[0] = c_fin.astype(cn_ref.dtype)


def _pick_chunk(seq, batch, max_chunk=32):
    """Largest T <= max_chunk with seq % T == 0 and (T*batch) % 8 == 0."""
    for t in range(min(seq, max_chunk), 0, -1):
        if seq % t == 0 and (t * batch) % 8 == 0:
            return t
    return seq  # fall back to a single full-sequence chunk


def lstm_layer_fused_pallas(x_parts, w_ih, w_hh, b, h0, c0, *, max_chunk=32):
    """One LSTM layer, all directions, full sequence, in a single pallas_call.

    x_parts: (P, seq, batch, F)   input parts (P=1 embedding, or P=D prev layer)
    w_ih:    (D, P, F, 4H)        per-direction input weights, split by part
    w_hh:    (D, H, 4H)
    b:       (D, 1, 4H)           b_ih + b_hh
    h0, c0:  (D, batch, H)
    Returns  y (D, seq, batch, H), h_n (D, batch, H), c_n (D, batch, H).
    """
    P, seq, batch, F = x_parts.shape
    D, H = w_hh.shape[0], w_hh.shape[1]

    T = _pick_chunk(seq, batch, max_chunk)
    nc = seq // T
    TB = T * batch

    # Time-major flatten so the kernel sees a 2D (T*batch, F) chunk per part.
    x_flat = x_parts.reshape(P, seq * batch, F)

    def chunk_idx(d, c):
        # forward direction: chunk c;  backward direction: chunk nc-1-c.
        return c * (1 - d) + (nc - 1 - c) * d

    x_map = lambda d, c: (0, chunk_idx(d, c), 0)
    y_map = lambda d, c: (d, chunk_idx(d, c), 0, 0)
    wih_map = lambda d, c: (d, 0, 0, 0)
    w3_map = lambda d, c: (d, 0, 0)

    y, hn, cn = pl.pallas_call(
        _fused_lstm_layer_kernel,
        out_shape=(
            jax.ShapeDtypeStruct((D, seq, batch, H), x_parts.dtype),
            jax.ShapeDtypeStruct((D, batch, H), x_parts.dtype),
            jax.ShapeDtypeStruct((D, batch, H), x_parts.dtype),
        ),
        grid=(D, nc),
        in_specs=[
            pl.BlockSpec((P, TB, F), x_map),               # x chunk (all parts)
            pl.BlockSpec((1, P, F, 4 * H), wih_map),       # W_ih (per direction)
            pl.BlockSpec((1, H, 4 * H), w3_map),           # W_hh
            pl.BlockSpec((1, 1, 4 * H), w3_map),           # bias
            pl.BlockSpec((1, batch, H), w3_map),           # h0
            pl.BlockSpec((1, batch, H), w3_map),           # c0
        ],
        out_specs=(
            pl.BlockSpec((1, T, batch, H), y_map),         # y chunk
            pl.BlockSpec((1, batch, H), w3_map),           # h_n
            pl.BlockSpec((1, batch, H), w3_map),           # c_n
        ),
        scratch_shapes=[
            pltpu.VMEM((D, batch, H), jnp.float32),        # h carry (per dir)
            pltpu.VMEM((D, batch, H), jnp.float32),        # c carry (per dir)
            pltpu.VMEM((T, batch, 4 * H), jnp.float32),    # staged gate inputs
        ],
        compiler_params=pltpu.CompilerParams(
            # Directions are independent (parallel; sharded across cores on
            # v7x); the chunk axis carries the recurrence state -> arbitrary.
            dimension_semantics=("parallel", "arbitrary")),
    )(x_flat, w_ih, w_hh, b, h0, c0)
    return y, hn, cn


# ----------------------------------------------------------------------------
# Pure-JAX reference (same math) for correctness checking.
# ----------------------------------------------------------------------------
def _lstm_layer_ref(x, w_ih, w_hh, b, h0, c0, *, reverse=False):
    H = w_hh.shape[0]

    def step(carry, x_t):
        h, c = carry
        gates = (x_t @ w_ih + b[0]) + h @ w_hh
        i_g = jax.nn.sigmoid(gates[:, 0 * H:1 * H])
        f_g = jax.nn.sigmoid(gates[:, 1 * H:2 * H])
        g_g = jnp.tanh(gates[:, 2 * H:3 * H])
        o_g = jax.nn.sigmoid(gates[:, 3 * H:4 * H])
        c_new = f_g * c + i_g * g_g
        h_new = o_g * jnp.tanh(c_new)
        return (h_new, c_new), h_new

    xs = x[::-1] if reverse else x
    (hn, cn), ys = jax.lax.scan(step, (h0, c0), xs)
    if reverse:
        ys = ys[::-1]
    return ys, hn, cn


# ----------------------------------------------------------------------------
# Encoder wrapper (mirrors the PyTorch Encoder forward semantics).
# ----------------------------------------------------------------------------
class PallasEncoder:
    def __init__(self, embedding_dim, hidden_dim, n_layers, dropout, bidir, key):
        self.embedding_dim = embedding_dim
        self.hidden_dim = hidden_dim // 2 if bidir else hidden_dim
        self.n_layers = n_layers
        self.bidir = bidir
        self.num_directions = 2 if bidir else 1
        # TODO(synk): inter-layer LSTM dropout is a training-time op; this
        # inference forward pass omits it (matches model.eval()).
        self.dropout = dropout

        H = self.hidden_dim
        D = self.num_directions
        scale = 1.0 / math.sqrt(H)
        params = []
        k = key
        for layer in range(n_layers):
            in_dim = embedding_dim if layer == 0 else H * D
            layer_params = []
            for _ in range(D):
                k, k1, k2, k3 = jax.random.split(k, 4)
                w_ih = jax.random.uniform(k1, (in_dim, 4 * H), jnp.float32,
                                          -scale, scale)
                w_hh = jax.random.uniform(k2, (H, 4 * H), jnp.float32,
                                          -scale, scale)
                b = jax.random.uniform(k3, (1, 4 * H), jnp.float32,
                                       -scale, scale)
                layer_params.append((w_ih, w_hh, b))
            params.append(layer_params)
        self.params = params

        # Pre-fused (stacked) parameters for the Pallas path:
        #   w_ih: (D, P, F, 4H)  w_hh: (D, H, 4H)  b: (D, 1, 4H)
        # TODO(synk): for large H on v6e/v7x, cast fused weights to bfloat16
        # (keep f32 accumulation) and single-buffer the resident weight specs.
        self.fused_params = []
        for layer in range(n_layers):
            P = 1 if layer == 0 else D
            in_dim = self.params[layer][0][0].shape[0]
            F = in_dim // P
            w_ih_f = jnp.stack(
                [self.params[layer][dd][0].reshape(P, F, 4 * H)
                 for dd in range(D)], axis=0)
            w_hh_f = jnp.stack([self.params[layer][dd][1] for dd in range(D)],
                               axis=0)
            b_f = jnp.stack([self.params[layer][dd][2] for dd in range(D)],
                            axis=0)
            self.fused_params.append((w_ih_f, w_hh_f, b_f))

    def init_hidden(self, embedded_inputs):
        batch = embedded_inputs.shape[0]
        shape = (self.n_layers * self.num_directions, batch, self.hidden_dim)
        return (jnp.zeros(shape, jnp.float32), jnp.zeros(shape, jnp.float32))

    # -------------------------- Pallas forward ------------------------------
    def forward(self, embedded_inputs, hidden, mask_length=None):
        # mask_length is accepted and ignored, same as the reference module.
        h0_all, c0_all = hidden
        batch, seq, _ = embedded_inputs.shape
        D = self.num_directions
        H = self.hidden_dim

        # (batch, seq, E) -> (1, seq, batch, E): a single input "part".
        parts = jnp.transpose(embedded_inputs, (1, 0, 2))[None]

        hn_list, cn_list = [], []
        for layer in range(self.n_layers):
            w_ih_f, w_hh_f, b_f = self.fused_params[layer]
            h0_l = h0_all[layer * D:(layer + 1) * D]
            c0_l = c0_all[layer * D:(layer + 1) * D]
            y, hn, cn = lstm_layer_fused_pallas(parts, w_ih_f, w_hh_f, b_f,
                                                h0_l, c0_l)
            hn_list.append(hn)
            cn_list.append(cn)
            # Direction-major outputs become the next layer's input parts
            # (no concat / HBM round trip between layers).
            parts = y                                  # (D, seq, batch, H)

        # (D, seq, batch, H) -> (batch, seq, D*H): matches torch's feature
        # ordering [fwd H | bwd H] and the module's output permute.
        outputs = jnp.transpose(parts, (2, 1, 0, 3)).reshape(batch, seq, D * H)
        h_n = jnp.concatenate(hn_list, axis=0)
        c_n = jnp.concatenate(cn_list, axis=0)
        return outputs, (h_n, c_n)

    # ------------------------ pure-JAX reference ----------------------------
    def forward_ref(self, embedded_inputs, hidden, mask_length=None):
        h0_all, c0_all = hidden
        x = jnp.transpose(embedded_inputs, (1, 0, 2))
        hn_list, cn_list = [], []
        for layer in range(self.n_layers):
            dir_outs = []
            for dd in range(self.num_directions):
                w_ih, w_hh, b = self.params[layer][dd]
                idx = layer * self.num_directions + dd
                y, hn, cn = _lstm_layer_ref(x, w_ih, w_hh, b,
                                            h0_all[idx], c0_all[idx],
                                            reverse=(dd == 1))
                dir_outs.append(y)
                hn_list.append(hn)
                cn_list.append(cn)
            x = (dir_outs[0] if self.num_directions == 1
                 else jnp.concatenate(dir_outs, axis=-1))
        outputs = jnp.transpose(x, (1, 0, 2))
        return outputs, (jnp.stack(hn_list, 0), jnp.stack(cn_list, 0))


if __name__ == "__main__":
    key = jax.random.PRNGKey(0)
    k_model, k_in = jax.random.split(key)

    # Small shapes consistent with the module: batch=2, seq=8, embedding=32,
    # hidden_dim=64 (bidirectional -> 32 per direction, gate width 4H = 128).
    batch, seq, embedding_dim, hidden_dim = 2, 8, 32, 64
    n_layers, bidir = 2, True

    enc = PallasEncoder(embedding_dim, hidden_dim, n_layers,
                        dropout=0.0, bidir=bidir, key=k_model)

    embedded_inputs = jax.random.normal(
        k_in, (batch, seq, embedding_dim), dtype=jnp.float32)
    hidden0 = enc.init_hidden(embedded_inputs)

    outputs, (h_n, c_n) = enc.forward(embedded_inputs, hidden0, mask_length=None)
    jax.block_until_ready((outputs, h_n, c_n))

    # Correctness check vs. pure-JAX reference LSTM.
    out_ref, (h_ref, c_ref) = enc.forward_ref(embedded_inputs, hidden0)
    num_dirs = 2 if bidir else 1
    assert outputs.shape == (batch, seq, hidden_dim)
    assert h_n.shape == (n_layers * num_dirs, batch, enc.hidden_dim)
    assert c_n.shape == (n_layers * num_dirs, batch, enc.hidden_dim)
    assert jnp.allclose(outputs, out_ref, atol=1e-4, rtol=1e-4), "outputs mismatch"
    assert jnp.allclose(h_n, h_ref, atol=1e-4, rtol=1e-4), "h_n mismatch"
    assert jnp.allclose(c_n, c_ref, atol=1e-4, rtol=1e-4), "c_n mismatch"

    print("KERNEL_OK")
</pallas_src>

<mosaic_0001>
module attributes {stable_mosaic.version = 11 : i64} {
  func.func @_fused_lstm_layer_kernel(%arg0: i32, %arg1: i32, %arg2: memref<1x16x32xf32, #tpu.memory_space<vmem>>, %arg3: memref<1x1x32x128xf32, #tpu.memory_space<vmem>>, %arg4: memref<1x32x128xf32, #tpu.memory_space<vmem>>, %arg5: memref<1x1x128xf32, #tpu.memory_space<vmem>>, %arg6: memref<1x2x32xf32, #tpu.memory_space<vmem>>, %arg7: memref<1x2x32xf32, #tpu.memory_space<vmem>>, %arg8: memref<1x8x2x32xf32, #tpu.memory_space<vmem>>, %arg9: memref<1x2x32xf32, #tpu.memory_space<vmem>>, %arg10: memref<1x2x32xf32, #tpu.memory_space<vmem>>, %arg11: memref<2x2x32xf32, #tpu.memory_space<vmem>>, %arg12: memref<2x2x32xf32, #tpu.memory_space<vmem>>, %arg13: memref<8x2x128xf32, #tpu.memory_space<vmem>>) attributes {dimension_semantics = [#tpu.dimension_semantics<parallel>, #tpu.dimension_semantics<arbitrary>], iteration_bounds = array<i64: 2, 1>, scalar_prefetch = 0 : i64, scratch_operands = 3 : i64, tpu.core_type = #tpu.core_type<tc>, window_params = [{transform_indices = @transform_0, window_bounds = array<i64: 1, 16, 32>}, {transform_indices = @transform_1, window_bounds = array<i64: 1, 1, 32, 128>}, {transform_indices = @transform_2, window_bounds = array<i64: 1, 32, 128>}, {transform_indices = @transform_3, window_bounds = array<i64: 1, 1, 128>}, {transform_indices = @transform_4, window_bounds = array<i64: 1, 2, 32>}, {transform_indices = @transform_5, window_bounds = array<i64: 1, 2, 32>}, {transform_indices = @transform_6, window_bounds = array<i64: 1, 8, 2, 32>}, {transform_indices = @transform_7, window_bounds = array<i64: 1, 2, 32>}, {transform_indices = @transform_8, window_bounds = array<i64: 1, 2, 32>}]} {
    %c0 = arith.constant 0 : index
    %c0_0 = arith.constant 0 : index
    %c0_1 = arith.constant 0 : index
    %0 = vector.load %arg2[%c0, %c0_0, %c0_1] : memref<1x16x32xf32, #tpu.memory_space<vmem>>, vector<1x16x32xf32>
    %1 = vector.shape_cast %0 : vector<1x16x32xf32> to vector<16x32xf32>
    %c0_2 = arith.constant 0 : index
    %c0_3 = arith.constant 0 : index
    %c0_4 = arith.constant 0 : index
    %c0_5 = arith.constant 0 : index
    %2 = vector.load %arg3[%c0_2, %c0_3, %c0_4, %c0_5] : memref<1x1x32x128xf32, #tpu.memory_space<vmem>>, vector<1x1x32x128xf32>
    %3 = vector.shape_cast %2 : vector<1x1x32x128xf32> to vector<32x128xf32>
    %cst = arith.constant dense<0.000000e+00> : vector<16x128xf32>
    %4 = tpu.matmul %1, %3, %cst {dimension_numbers = #tpu.dot_dimension_numbers<[1], [0], [0], [1], [0, 0, 1, 1], [], []>} : vector<16x32xf32>, vector<32x128xf32>, vector<16x128xf32> -> vector<16x128xf32>
    %c0_6 = arith.constant 0 : index
    %c0_7 = arith.constant 0 : index
    %c0_8 = arith.constant 0 : index
    %5 = vector.load %arg5[%c0_6, %c0_7, %c0_8] : memref<1x1x128xf32, #tpu.memory_space<vmem>>, vector<1x1x128xf32>
    %6 = vector.shape_cast %5 : vector<1x1x128xf32> to vector<1x128xf32>
    %7 = vector.broadcast %6 : vector<1x128xf32> to vector<16x128xf32>
    %8 = arith.addf %4, %7 : vector<16x128xf32>
    %9 = vector.extract_strided_slice %8 {offsets = [0, 0], sizes = [2, 128], strides = [1, 1]} : vector<16x128xf32> to vector<2x128xf32>
    %c0_9 = arith.constant 0 : index
    %c0_10 = arith.constant 0 : index
    %c0_11 = arith.constant 0 : index
    %10 = vector.load %arg13[%c0_9, %c0_10, %c0_11] : memref<8x2x128xf32, #tpu.memory_space<vmem>>, vector<1x2x128xf32>
    %11 = vector.shape_cast %10 : vector<1x2x128xf32> to vector<2x128xf32>
    %12 = vector.shape_cast %9 : vector<2x128xf32> to vector<1x2x128xf32>
    tpu.vector_store %arg13[%c0_9, %c0_10, %c0_11], %12 {strides = array<i32>} : memref<8x2x128xf32, #tpu.memory_space<vmem>>, vector<1x2x128xf32>,
    %13 = vector.extract_strided_slice %8 {offsets = [2, 0], sizes = [2, 128], strides = [1, 1]} : vector<16x128xf32> to vector<2x128xf32>
    %c1 = arith.constant 1 : index
    %c0_12 = arith.constant 0 : index
    %c0_13 = arith.constant 0 : index
    %14 = vector.load %arg13[%c1, %c0_12, %c0_13] : memref<8x2x128xf32, #tpu.memory_space<vmem>>, vector<1x2x128xf32>
    %15 = vector.shape_cast %14 : vector<1x2x128xf32> to vector<2x128xf32>
    %16 = vector.shape_cast %13 : vector<2x128xf32> to vector<1x2x128xf32>
    tpu.vector_store %arg13[%c1, %c0_12, %c0_13], %16 {strides = array<i32>} : memref<8x2x128xf32, #tpu.memory_space<vmem>>, vector<1x2x128xf32>,
    %17 = vector.extract_strided_slice %8 {offsets = [4, 0], sizes = [2, 128], strides = [1, 1]} : vector<16x128xf32> to vector<2x128xf32>
    %c2 = arith.constant 2 : index
    %c0_14 = arith.constant 0 : index
    %c0_15 = arith.constant 0 : index
    %18 = vector.load %arg13[%c2, %c0_14, %c0_15] : memref<8x2x128xf32, #tpu.memory_space<vmem>>, vector<1x2x128xf32>
    %19 = vector.shape_cast %18 : vector<1x2x128xf32> to vector<2x128xf32>
    %20 = vector.shape_cast %17 : vector<2x128xf32> to vector<1x2x128xf32>
    tpu.vector_store %arg13[%c2, %c0_14, %c0_15], %20 {strides = array<i32>} : memref<8x2x128xf32, #tpu.memory_space<vmem>>, vector<1x2x128xf32>,
    %21 = vector.extract_strided_slice %8 {offsets = [6, 0], sizes = [2, 128], strides = [1, 1]} : vector<16x128xf32> to vector<2x128xf32>
    %c3 = arith.constant 3 : index
    %c0_16 = arith.constant 0 : index
    %c0_17 = arith.constant 0 : index
    %22 = vector.load %arg13[%c3, %c0_16, %c0_17] : memref<8x2x128xf32, #tpu.memory_space<vmem>>, vector<1x2x128xf32>
    %23 = vector.shape_cast %22 : vector<1x2x128xf32> to vector<2x128xf32>
    %24 = vector.shape_cast %21 : vector<2x128xf32> to vector<1x2x128xf32>
    tpu.vector_store %arg13[%c3, %c0_16, %c0_17], %24 {strides = array<i32>} : memref<8x2x128xf32, #tpu.memory_space<vmem>>, vector<1x2x128xf32>,
    %25 = vector.extract_strided_slice %8 {offsets = [8, 0], sizes = [2, 128], strides = [1, 1]} : vector<16x128xf32> to vector<2x128xf32>
    %c4 = arith.constant 4 : index
    %c0_18 = arith.constant 0 : index
    %c0_19 = arith.constant 0 : index
    %26 = vector.load %arg13[%c4, %c0_18, %c0_19] : memref<8x2x128xf32, #tpu.memory_space<vmem>>, vector<1x2x128xf32>
    %27 = vector.shape_cast %26 : vector<1x2x128xf32> to vector<2x128xf32>
    %28 = vector.shape_cast %25 : vector<2x128xf32> to vector<1x2x128xf32>
    tpu.vector_store %arg13[%c4, %c0_18, %c0_19], %28 {strides = array<i32>} : memref<8x2x128xf32, #tpu.memory_space<vmem>>, vector<1x2x128xf32>,
    %29 = vector.extract_strided_slice %8 {offsets = [10, 0], sizes = [2, 128], strides = [1, 1]} : vector<16x128xf32> to vector<2x128xf32>
    %c5 = arith.constant 5 : index
    %c0_20 = arith.constant 0 : index
    %c0_21 = arith.constant 0 : index
    %30 = vector.load %arg13[%c5, %c0_20, %c0_21] : memref<8x2x128xf32, #tpu.memory_space<vmem>>, vector<1x2x128xf32>
    %31 = vector.shape_cast %30 : vector<1x2x128xf32> to vector<2x128xf32>
    %32 = vector.shape_cast %29 : vector<2x128xf32> to vector<1x2x128xf32>
    tpu.vector_store %arg13[%c5, %c0_20, %c0_21], %32 {strides = array<i32>} : memref<8x2x128xf32, #tpu.memory_space<vmem>>, vector<1x2x128xf32>,
    %33 = vector.extract_strided_slice %8 {offsets = [12, 0], sizes = [2, 128], strides = [1, 1]} : vector<16x128xf32> to vector<2x128xf32>
    %c6 = arith.constant 6 : index
    %c0_22 = arith.constant 0 : index
    %c0_23 = arith.constant 0 : index
    %34 = vector.load %arg13[%c6, %c0_22, %c0_23] : memref<8x2x128xf32, #tpu.memory_space<vmem>>, vector<1x2x128xf32>
    %35 = vector.shape_cast %34 : vector<1x2x128xf32> to vector<2x128xf32>
    %36 = vector.shape_cast %33 : vector<2x128xf32> to vector<1x2x128xf32>
    tpu.vector_store %arg13[%c6, %c0_22, %c0_23], %36 {strides = array<i32>} : memref<8x2x128xf32, #tpu.memory_space<vmem>>, vector<1x2x128xf32>,
    %37 = vector.extract_strided_slice %8 {offsets = [14, 0], sizes = [2, 128], strides = [1, 1]} : vector<16x128xf32> to vector<2x128xf32>
    %c7 = arith.constant 7 : index
    %c0_24 = arith.constant 0 : index
    %c0_25 = arith.constant 0 : index
    %38 = vector.load %arg13[%c7, %c0_24, %c0_25] : memref<8x2x128xf32, #tpu.memory_space<vmem>>, vector<1x2x128xf32>
    %39 = vector.shape_cast %38 : vector<1x2x128xf32> to vector<2x128xf32>
    %40 = vector.shape_cast %37 : vector<2x128xf32> to vector<1x2x128xf32>
    tpu.vector_store %arg13[%c7, %c0_24, %c0_25], %40 {strides = array<i32>} : memref<8x2x128xf32, #tpu.memory_space<vmem>>, vector<1x2x128xf32>,
    %c0_i32 = arith.constant 0 : i32
    %41 = arith.cmpi eq, %arg1, %c0_i32 : i32
    %42 = arith.extui %41 : i1 to i32
    %c0_i32_26 = arith.constant 0 : i32
    %43 = arith.cmpi ne, %42, %c0_i32_26 : i32
    scf.if %43 {
      %c0_129 = arith.constant 0 : index
      %c0_130 = arith.constant 0 : index
      %c0_131 = arith.constant 0 : index
      %359 = vector.load %arg6[%c0_129, %c0_130, %c0_131] : memref<1x2x32xf32, #tpu.memory_space<vmem>>, vector<1x2x32xf32>
      %360 = vector.shape_cast %359 : vector<1x2x32xf32> to vector<2x32xf32>
      %361 = arith.index_cast %arg0 : i32 to index
      %c0_132 = arith.constant 0 : index
      %c0_133 = arith.constant 0 : index
      %362 = vector.load %arg11[%361, %c0_132, %c0_133] : memref<2x2x32xf32, #tpu.memory_space<vmem>>, vector<1x2x32xf32>
      %363 = vector.shape_cast %362 : vector<1x2x32xf32> to vector<2x32xf32>
      %364 = vector.shape_cast %360 : vector<2x32xf32> to vector<1x2x32xf32>
      tpu.vector_store %arg11[%361, %c0_132, %c0_133], %364 {strides = array<i32>} : memref<2x2x32xf32, #tpu.memory_space<vmem>>, vector<1x2x32xf32>,
      %c0_134 = arith.constant 0 : index
      %c0_135 = arith.constant 0 : index
      %c0_136 = arith.constant 0 : index
      %365 = vector.load %arg7[%c0_134, %c0_135, %c0_136] : memref<1x2x32xf32, #tpu.memory_space<vmem>>, vector<1x2x32xf32>
      %366 = vector.shape_cast %365 : vector<1x2x32xf32> to vector<2x32xf32>
      %367 = arith.index_cast %arg0 : i32 to index
      %c0_137 = arith.constant 0 : index
      %c0_138 = arith.constant 0 : index
      %368 = vector.load %arg12[%367, %c0_137, %c0_138] : memref<2x2x32xf32, #tpu.memory_space<vmem>>, vector<1x2x32xf32>
      %369 = vector.shape_cast %368 : vector<1x2x32xf32> to vector<2x32xf32>
      %370 = vector.shape_cast %366 : vector<2x32xf32> to vector<1x2x32xf32>
      tpu.vector_store %arg12[%367, %c0_137, %c0_138], %370 {strides = array<i32>} : memref<2x2x32xf32, #tpu.memory_space<vmem>>, vector<1x2x32xf32>,
    } else {
    }
    %c0_27 = arith.constant 0 : index
    %c0_28 = arith.constant 0 : index
    %c0_29 = arith.constant 0 : index
    %44 = vector.load %arg4[%c0_27, %c0_28, %c0_29] : memref<1x32x128xf32, #tpu.memory_space<vmem>>, vector<1x32x128xf32>
    %45 = vector.shape_cast %44 : vector<1x32x128xf32> to vector<32x128xf32>
    %46 = arith.index_cast %arg0 : i32 to index
    %c0_30 = arith.constant 0 : index
    %c0_31 = arith.constant 0 : index
    %47 = vector.load %arg11[%46, %c0_30, %c0_31] : memref<2x2x32xf32, #tpu.memory_space<vmem>>, vector<1x2x32xf32>
    %48 = vector.shape_cast %47 : vector<1x2x32xf32> to vector<2x32xf32>
    %49 = arith.index_cast %arg0 : i32 to index
    %c0_32 = arith.constant 0 : index
    %c0_33 = arith.constant 0 : index
    %50 = vector.load %arg12[%49, %c0_32, %c0_33] : memref<2x2x32xf32, #tpu.memory_space<vmem>>, vector<1x2x32xf32>
    %51 = vector.shape_cast %50 : vector<1x2x32xf32> to vector<2x32xf32>
    %c0_i32_34 = arith.constant 0 : i32
    %c0_i32_35 = arith.constant 0 : i32
    %52 = arith.cmpi eq, %arg0, %c0_i32_35 : i32
    %c7_i32 = arith.constant 7 : i32
    %53 = arith.subi %c7_i32, %c0_i32_34 : i32
    %54 = arith.select %52, %c0_i32_34, %53 : i32
    %55 = arith.index_cast %54 : i32 to index
    %c0_36 = arith.constant 0 : index
    %c0_37 = arith.constant 0 : index
    %56 = vector.load %arg13[%55, %c0_36, %c0_37] : memref<8x2x128xf32, #tpu.memory_space<vmem>>, vector<1x2x128xf32>
    %57 = vector.shape_cast %56 : vector<1x2x128xf32> to vector<2x128xf32>
    %cst_38 = arith.constant dense<0.000000e+00> : vector<2x128xf32>
    %58 = tpu.matmul %48, %45, %cst_38 {dimension_numbers = #tpu.dot_dimension_numbers<[1], [0], [0], [1], [0, 0, 1, 1], [], []>} : vector<2x32xf32>, vector<32x128xf32>, vector<2x128xf32> -> vector<2x128xf32>
    %59 = arith.addf %57, %58 : vector<2x128xf32>
    %60 = vector.extract_strided_slice %59 {offsets = [0, 0], sizes = [2, 32], strides = [1, 1]} : vector<2x128xf32> to vector<2x32xf32>
    %61 = arith.negf %60 : vector<2x32xf32>
    %62 = math.exp %61 : vector<2x32xf32>
    %cst_39 = arith.constant 1.000000e+00 : f32
    %63 = vector.broadcast %cst_39 : f32 to vector<2x32xf32>
    %64 = arith.addf %63, %62 : vector<2x32xf32>
    %65 = arith.divf %63, %64 : vector<2x32xf32>
    %66 = vector.extract_strided_slice %59 {offsets = [0, 32], sizes = [2, 32], strides = [1, 1]} : vector<2x128xf32> to vector<2x32xf32>
    %67 = arith.negf %66 : vector<2x32xf32>
    %68 = math.exp %67 : vector<2x32xf32>
    %cst_40 = arith.constant 1.000000e+00 : f32
    %69 = vector.broadcast %cst_40 : f32 to vector<2x32xf32>
    %70 = arith.addf %69, %68 : vector<2x32xf32>
    %71 = arith.divf %69, %70 : vector<2x32xf32>
    %72 = vector.extract_strided_slice %59 {offsets = [0, 64], sizes = [2, 32], strides = [1, 1]} : vector<2x128xf32> to vector<2x32xf32>
    %73 = math.tanh %72 : vector<2x32xf32>
    %74 = vector.extract_strided_slice %59 {offsets = [0, 96], sizes = [2, 32], strides = [1, 1]} : vector<2x128xf32> to vector<2x32xf32>
    %75 = arith.negf %74 : vector<2x32xf32>
    %76 = math.exp %75 : vector<2x32xf32>
    %cst_41 = arith.constant 1.000000e+00 : f32
    %77 = vector.broadcast %cst_41 : f32 to vector<2x32xf32>
    %78 = arith.addf %77, %76 : vector<2x32xf32>
    %79 = arith.divf %77, %78 : vector<2x32xf32>
    %80 = arith.mulf %71, %51 : vector<2x32xf32>
    %81 = arith.mulf %65, %73 : vector<2x32xf32>
    %82 = arith.addf %80, %81 : vector<2x32xf32>
    %83 = math.tanh %82 : vector<2x32xf32>
    %84 = arith.mulf %79, %83 : vector<2x32xf32>
    %c0_42 = arith.constant 0 : index
    %85 = arith.index_cast %54 : i32 to index
    %c0_43 = arith.constant 0 : index
    %c0_44 = arith.constant 0 : index
    %86 = vector.load %arg8[%c0_42, %85, %c0_43, %c0_44] : memref<1x8x2x32xf32, #tpu.memory_space<vmem>>, vector<1x1x2x32xf32>
    %87 = vector.shape_cast %86 : vector<1x1x2x32xf32> to vector<2x32xf32>
    %88 = vector.shape_cast %84 : vector<2x32xf32> to vector<1x1x2x32xf32>
    tpu.vector_store %arg8[%c0_42, %85, %c0_43, %c0_44], %88 {strides = array<i32>} : memref<1x8x2x32xf32, #tpu.memory_space<vmem>>, vector<1x1x2x32xf32>,
    %c1_i32 = arith.constant 1 : i32
    %c0_i32_45 = arith.constant 0 : i32
    %89 = arith.cmpi eq, %arg0, %c0_i32_45 : i32
    %c7_i32_46 = arith.constant 7 : i32
    %90 = arith.subi %c7_i32_46, %c1_i32 : i32
    %91 = arith.select %89, %c1_i32, %90 : i32
    %92 = arith.index_cast %91 : i32 to index
    %c0_47 = arith.constant 0 : index
    %c0_48 = arith.constant 0 : index
    %93 = vector.load %arg13[%92, %c0_47, %c0_48] : memref<8x2x128xf32, #tpu.memory_space<vmem>>, vector<1x2x128xf32>
    %94 = vector.shape_cast %93 : vector<1x2x128xf32> to vector<2x128xf32>
    %cst_49 = arith.constant dense<0.000000e+00> : vector<2x128xf32>
    %95 = tpu.matmul %84, %45, %cst_49 {dimension_numbers = #tpu.dot_dimension_numbers<[1], [0], [0], [1], [0, 0, 1, 1], [], []>} : vector<2x32xf32>, vector<32x128xf32>, vector<2x128xf32> -> vector<2x128xf32>
    %96 = arith.addf %94, %95 : vector<2x128xf32>
    %97 = vector.extract_strided_slice %96 {offsets = [0, 0], sizes = [2, 32], strides = [1, 1]} : vector<2x128xf32> to vector<2x32xf32>
    %98 = arith.negf %97 : vector<2x32xf32>
    %99 = math.exp %98 : vector<2x32xf32>
    %cst_50 = arith.constant 1.000000e+00 : f32
    %100 = vector.broadcast %cst_50 : f32 to vector<2x32xf32>
    %101 = arith.addf %100, %99 : vector<2x32xf32>
    %102 = arith.divf %100, %101 : vector<2x32xf32>
    %103 = vector.extract_strided_slice %96 {offsets = [0, 32], sizes = [2, 32], strides = [1, 1]} : vector<2x128xf32> to vector<2x32xf32>
    %104 = arith.negf %103 : vector<2x32xf32>
    %105 = math.exp %104 : vector<2x32xf32>
    %cst_51 = arith.constant 1.000000e+00 : f32
    %106 = vector.broadcast %cst_51 : f32 to vector<2x32xf32>
    %107 = arith.addf %106, %105 : vector<2x32xf32>
    %108 = arith.divf %106, %107 : vector<2x32xf32>
    %109 = vector.extract_strided_slice %96 {offsets = [0, 64], sizes = [2, 32], strides = [1, 1]} : vector<2x128xf32> to vector<2x32xf32>
    %110 = math.tanh %109 : vector<2x32xf32>
    %111 = vector.extract_strided_slice %96 {offsets = [0, 96], sizes = [2, 32], strides = [1, 1]} : vector<2x128xf32> to vector<2x32xf32>
    %112 = arith.negf %111 : vector<2x32xf32>
    %113 = math.exp %112 : vector<2x32xf32>
    %cst_52 = arith.constant 1.000000e+00 : f32
    %114 = vector.broadcast %cst_52 : f32 to vector<2x32xf32>
    %115 = arith.addf %114, %113 : vector<2x32xf32>
    %116 = arith.divf %114, %115 : vector<2x32xf32>
    %117 = arith.mulf %108, %82 : vector<2x32xf32>
    %118 = arith.mulf %102, %110 : vector<2x32xf32>
    %119 = arith.addf %117, %118 : vector<2x32xf32>
    %120 = math.tanh %119 : vector<2x32xf32>
    %121 = arith.mulf %116, %120 : vector<2x32xf32>
    %c0_53 = arith.constant 0 : index
    %122 = arith.index_cast %91 : i32 to index
    %c0_54 = arith.constant 0 : index
    %c0_55 = arith.constant 0 : index
    %123 = vector.load %arg8[%c0_53, %122, %c0_54, %c0_55] : memref<1x8x2x32xf32, #tpu.memory_space<vmem>>, vector<1x1x2x32xf32>
    %124 = vector.shape_cast %123 : vector<1x1x2x32xf32> to vector<2x32xf32>
    %125 = vector.shape_cast %121 : vector<2x32xf32> to vector<1x1x2x32xf32>
    tpu.vector_store %arg8[%c0_53, %122, %c0_54, %c0_55], %125 {strides = array<i32>} : memref<1x8x2x32xf32, #tpu.memory_space<vmem>>, vector<1x1x2x32xf32>,
    %c2_i32 = arith.constant 2 : i32
    %c0_i32_56 = arith.constant 0 : i32
    %126 = arith.cmpi eq, %arg0, %c0_i32_56 : i32
    %c7_i32_57 = arith.constant 7 : i32
    %127 = arith.subi %c7_i32_57, %c2_i32 : i32
    %128 = arith.select %126, %c2_i32, %127 : i32
    %129 = arith.index_cast %128 : i32 to index
    %c0_58 = arith.constant 0 : index
    %c0_59 = arith.constant 0 : index
    %130 = vector.load %arg13[%129, %c0_58, %c0_59] : memref<8x2x128xf32, #tpu.memory_space<vmem>>, vector<1x2x128xf32>
    %131 = vector.shape_cast %130 : vector<1x2x128xf32> to vector<2x128xf32>
    %cst_60 = arith.constant dense<0.000000e+00> : vector<2x128xf32>
    %132 = tpu.matmul %121, %45, %cst_60 {dimension_numbers = #tpu.dot_dimension_numbers<[1], [0], [0], [1], [0, 0, 1, 1], [], []>} : vector<2x32xf32>, vector<32x128xf32>, vector<2x128xf32> -> vector<2x128xf32>
    %133 = arith.addf %131, %132 : vector<2x128xf32>
    %134 = vector.extract_strided_slice %133 {offsets = [0, 0], sizes = [2, 32], strides = [1, 1]} : vector<2x128xf32> to vector<2x32xf32>
    %135 = arith.negf %134 : vector<2x32xf32>
    %136 = math.exp %135 : vector<2x32xf32>
    %cst_61 = arith.constant 1.000000e+00 : f32
    %137 = vector.broadcast %cst_61 : f32 to vector<2x32xf32>
    %138 = arith.addf %137, %136 : vector<2x32xf32>
    %139 = arith.divf %137, %138 : vector<2x32xf32>
    %140 = vector.extract_strided_slice %133 {offsets = [0, 32], sizes = [2, 32], strides = [1, 1]} : vector<2x128xf32> to vector<2x32xf32>
    %141 = arith.negf %140 : vector<2x32xf32>
    %142 = math.exp %141 : vector<2x32xf32>
    %cst_62 = arith.constant 1.000000e+00 : f32
    %143 = vector.broadcast %cst_62 : f32 to vector<2x32xf32>
    %144 = arith.addf %143, %142 : vector<2x32xf32>
    %145 = arith.divf %143, %144 : vector<2x32xf32>
    %146 = vector.extract_strided_slice %133 {offsets = [0, 64], sizes = [2, 32], strides = [1, 1]} : vector<2x128xf32> to vector<2x32xf32>
    %147 = math.tanh %146 : vector<2x32xf32>
    %148 = vector.extract_strided_slice %133 {offsets = [0, 96], sizes = [2, 32], strides = [1, 1]} : vector<2x128xf32> to vector<2x32xf32>
    %149 = arith.negf %148 : vector<2x32xf32>
    %150 = math.exp %149 : vector<2x32xf32>
    %cst_63 = arith.constant 1.000000e+00 : f32
    %151 = vector.broadcast %cst_63 : f32 to vector<2x32xf32>
    %152 = arith.addf %151, %150 : vector<2x32xf32>
    %153 = arith.divf %151, %152 : vector<2x32xf32>
    %154 = arith.mulf %145, %119 : vector<2x32xf32>
    %155 = arith.mulf %139, %147 : vector<2x32xf32>
    %156 = arith.addf %154, %155 : vector<2x32xf32>
    %157 = math.tanh %156 : vector<2x32xf32>
    %158 = arith.mulf %153, %157 : vector<2x32xf32>
    %c0_64 = arith.constant 0 : index
    %159 = arith.index_cast %128 : i32 to index
    %c0_65 = arith.constant 0 : index
    %c0_66 = arith.constant 0 : index
    %160 = vector.load %arg8[%c0_64, %159, %c0_65, %c0_66] : memref<1x8x2x32xf32, #tpu.memory_space<vmem>>, vector<1x1x2x32xf32>
    %161 = vector.shape_cast %160 : vector<1x1x2x32xf32> to vector<2x32xf32>
    %162 = vector.shape_cast %158 : vector<2x32xf32> to vector<1x1x2x32xf32>
    tpu.vector_store %arg8[%c0_64, %159, %c0_65, %c0_66], %162 {strides = array<i32>} : memref<1x8x2x32xf32, #tpu.memory_space<vmem>>, vector<1x1x2x32xf32>,
    %c3_i32 = arith.constant 3 : i32
    %c0_i32_67 = arith.constant 0 : i32
    %163 = arith.cmpi eq, %arg0, %c0_i32_67 : i32
    %c7_i32_68 = arith.constant 7 : i32
    %164 = arith.subi %c7_i32_68, %c3_i32 : i32
    %165 = arith.select %163, %c3_i32, %164 : i32
    %166 = arith.index_cast %165 : i32 to index
    %c0_69 = arith.constant 0 : index
    %c0_70 = arith.constant 0 : index
    %167 = vector.load %arg13[%166, %c0_69, %c0_70] : memref<8x2x128xf32, #tpu.memory_space<vmem>>, vector<1x2x128xf32>
    %168 = vector.shape_cast %167 : vector<1x2x128xf32> to vector<2x128xf32>
    %cst_71 = arith.constant dense<0.000000e+00> : vector<2x128xf32>
    %169 = tpu.matmul %158, %45, %cst_71 {dimension_numbers = #tpu.dot_dimension_numbers<[1], [0], [0], [1], [0, 0, 1, 1], [], []>} : vector<2x32xf32>, vector<32x128xf32>, vector<2x128xf32> -> vector<2x128xf32>
    %170 = arith.addf %168, %169 : vector<2x128xf32>
    %171 = vector.extract_strided_slice %170 {offsets = [0, 0], sizes = [2, 32], strides = [1, 1]} : vector<2x128xf32> to vector<2x32xf32>
    %172 = arith.negf %171 : vector<2x32xf32>
    %173 = math.exp %172 : vector<2x32xf32>
    %cst_72 = arith.constant 1.000000e+00 : f32
    %174 = vector.broadcast %cst_72 : f32 to vector<2x32xf32>
    %175 = arith.addf %174, %173 : vector<2x32xf32>
    %176 = arith.divf %174, %175 : vector<2x32xf32>
    %177 = vector.extract_strided_slice %170 {offsets = [0, 32], sizes = [2, 32], strides = [1, 1]} : vector<2x128xf32> to vector<2x32xf32>
    %178 = arith.negf %177 : vector<2x32xf32>
    %179 = math.exp %178 : vector<2x32xf32>
    %cst_73 = arith.constant 1.000000e+00 : f32
    %180 = vector.broadcast %cst_73 : f32 to vector<2x32xf32>
    %181 = arith.addf %180, %179 : vector<2x32xf32>
    %182 = arith.divf %180, %181 : vector<2x32xf32>
    %183 = vector.extract_strided_slice %170 {offsets = [0, 64], sizes = [2, 32], strides = [1, 1]} : vector<2x128xf32> to vector<2x32xf32>
    %184 = math.tanh %183 : vector<2x32xf32>
    %185 = vector.extract_strided_slice %170 {offsets = [0, 96], sizes = [2, 32], strides = [1, 1]} : vector<2x128xf32> to vector<2x32xf32>
    %186 = arith.negf %185 : vector<2x32xf32>
    %187 = math.exp %186 : vector<2x32xf32>
    %cst_74 = arith.constant 1.000000e+00 : f32
    %188 = vector.broadcast %cst_74 : f32 to vector<2x32xf32>
    %189 = arith.addf %188, %187 : vector<2x32xf32>
    %190 = arith.divf %188, %189 : vector<2x32xf32>
    %191 = arith.mulf %182, %156 : vector<2x32xf32>
    %192 = arith.mulf %176, %184 : vector<2x32xf32>
    %193 = arith.addf %191, %192 : vector<2x32xf32>
    %194 = math.tanh %193 : vector<2x32xf32>
    %195 = arith.mulf %190, %194 : vector<2x32xf32>
    %c0_75 = arith.constant 0 : index
    %196 = arith.index_cast %165 : i32 to index
    %c0_76 = arith.constant 0 : index
    %c0_77 = arith.constant 0 : index
    %197 = vector.load %arg8[%c0_75, %196, %c0_76, %c0_77] : memref<1x8x2x32xf32, #tpu.memory_space<vmem>>, vector<1x1x2x32xf32>
    %198 = vector.shape_cast %197 : vector<1x1x2x32xf32> to vector<2x32xf32>
    %199 = vector.shape_cast %195 : vector<2x32xf32> to vector<1x1x2x32xf32>
    tpu.vector_store %arg8[%c0_75, %196, %c0_76, %c0_77], %199 {strides = array<i32>} : memref<1x8x2x32xf32, #tpu.memory_space<vmem>>, vector<1x1x2x32xf32>,
    %c4_i32 = arith.constant 4 : i32
    %c0_i32_78 = arith.constant 0 : i32
    %200 = arith.cmpi eq, %arg0, %c0_i32_78 : i32
    %c7_i32_79 = arith.constant 7 : i32
    %201 = arith.subi %c7_i32_79, %c4_i32 : i32
    %202 = arith.select %200, %c4_i32, %201 : i32
    %203 = arith.index_cast %202 : i32 to index
    %c0_80 = arith.constant 0 : index
    %c0_81 = arith.constant 0 : index
    %204 = vector.load %arg13[%203, %c0_80, %c0_81] : memref<8x2x128xf32, #tpu.memory_space<vmem>>, vector<1x2x128xf32>
    %205 = vector.shape_cast %204 : vector<1x2x128xf32> to vector<2x128xf32>
    %cst_82 = arith.constant dense<0.000000e+00> : vector<2x128xf32>
    %206 = tpu.matmul %195, %45, %cst_82 {dimension_numbers = #tpu.dot_dimension_numbers<[1], [0], [0], [1], [0, 0, 1, 1], [], []>} : vector<2x32xf32>, vector<32x128xf32>, vector<2x128xf32> -> vector<2x128xf32>
    %207 = arith.addf %205, %206 : vector<2x128xf32>
    %208 = vector.extract_strided_slice %207 {offsets = [0, 0], sizes = [2, 32], strides = [1, 1]} : vector<2x128xf32> to vector<2x32xf32>
    %209 = arith.negf %208 : vector<2x32xf32>
    %210 = math.exp %209 : vector<2x32xf32>
    %cst_83 = arith.constant 1.000000e+00 : f32
    %211 = vector.broadcast %cst_83 : f32 to vector<2x32xf32>
    %212 = arith.addf %211, %210 : vector<2x32xf32>
    %213 = arith.divf %211, %212 : vector<2x32xf32>
    %214 = vector.extract_strided_slice %207 {offsets = [0, 32], sizes = [2, 32], strides = [1, 1]} : vector<2x128xf32> to vector<2x32xf32>
    %215 = arith.negf %214 : vector<2x32xf32>
    %216 = math.exp %215 : vector<2x32xf32>
    %cst_84 = arith.constant 1.000000e+00 : f32
    %217 = vector.broadcast %cst_84 : f32 to vector<2x32xf32>
    %218 = arith.addf %217, %216 : vector<2x32xf32>
    %219 = arith.divf %217, %218 : vector<2x32xf32>
    %220 = vector.extract_strided_slice %207 {offsets = [0, 64], sizes = [2, 32], strides = [1, 1]} : vector<2x128xf32> to vector<2x32xf32>
    %221 = math.tanh %220 : vector<2x32xf32>
    %222 = vector.extract_strided_slice %207 {offsets = [0, 96], sizes = [2, 32], strides = [1, 1]} : vector<2x128xf32> to vector<2x32xf32>
    %223 = arith.negf %222 : vector<2x32xf32>
    %224 = math.exp %223 : vector<2x32xf32>
    %cst_85 = arith.constant 1.000000e+00 : f32
    %225 = vector.broadcast %cst_85 : f32 to vector<2x32xf32>
    %226 = arith.addf %225, %224 : vector<2x32xf32>
    %227 = arith.divf %225, %226 : vector<2x32xf32>
    %228 = arith.mulf %219, %193 : vector<2x32xf32>
    %229 = arith.mulf %213, %221 : vector<2x32xf32>
    %230 = arith.addf %228, %229 : vector<2x32xf32>
    %231 = math.tanh %230 : vector<2x32xf32>
    %232 = arith.mulf %227, %231 : vector<2x32xf32>
    %c0_86 = arith.constant 0 : index
    %233 = arith.index_cast %202 : i32 to index
    %c0_87 = arith.constant 0 : index
    %c0_88 = arith.constant 0 : index
    %234 = vector.load %arg8[%c0_86, %233, %c0_87, %c0_88] : memref<1x8x2x32xf32, #tpu.memory_space<vmem>>, vector<1x1x2x32xf32>
    %235 = vector.shape_cast %234 : vector<1x1x2x32xf32> to vector<2x32xf32>
    %236 = vector.shape_cast %232 : vector<2x32xf32> to vector<1x1x2x32xf32>
    tpu.vector_store %arg8[%c0_86, %233, %c0_87, %c0_88], %236 {strides = array<i32>} : memref<1x8x2x32xf32, #tpu.memory_space<vmem>>, vector<1x1x2x32xf32>,
    %c5_i32 = arith.constant 5 : i32
    %c0_i32_89 = arith.constant 0 : i32
    %237 = arith.cmpi eq, %arg0, %c0_i32_89 : i32
    %c7_i32_90 = arith.constant 7 : i32
    %238 = arith.subi %c7_i32_90, %c5_i32 : i32
    %239 = arith.select %237, %c5_i32, %238 : i32
    %240 = arith.index_cast %239 : i32 to index
    %c0_91 = arith.constant 0 : index
    %c0_92 = arith.constant 0 : index
    %241 = vector.load %arg13[%240, %c0_91, %c0_92] : memref<8x2x128xf32, #tpu.memory_space<vmem>>, vector<1x2x128xf32>
    %242 = vector.shape_cast %241 : vector<1x2x128xf32> to vector<2x128xf32>
    %cst_93 = arith.constant dense<0.000000e+00> : vector<2x128xf32>
    %243 = tpu.matmul %232, %45, %cst_93 {dimension_numbers = #tpu.dot_dimension_numbers<[1], [0], [0], [1], [0, 0, 1, 1], [], []>} : vector<2x32xf32>, vector<32x128xf32>, vector<2x128xf32> -> vector<2x128xf32>
    %244 = arith.addf %242, %243 : vector<2x128xf32>
    %245 = vector.extract_strided_slice %244 {offsets = [0, 0], sizes = [2, 32], strides = [1, 1]} : vector<2x128xf32> to vector<2x32xf32>
    %246 = arith.negf %245 : vector<2x32xf32>
    %247 = math.exp %246 : vector<2x32xf32>
    %cst_94 = arith.constant 1.000000e+00 : f32
    %248 = vector.broadcast %cst_94 : f32 to vector<2x32xf32>
    %249 = arith.addf %248, %247 : vector<2x32xf32>
    %250 = arith.divf %248, %249 : vector<2x32xf32>
    %251 = vector.extract_strided_slice %244 {offsets = [0, 32], sizes = [2, 32], strides = [1, 1]} : vector<2x128xf32> to vector<2x32xf32>
    %252 = arith.negf %251 : vector<2x32xf32>
    %253 = math.exp %252 : vector<2x32xf32>
    %cst_95 = arith.constant 1.000000e+00 : f32
    %254 = vector.broadcast %cst_95 : f32 to vector<2x32xf32>
    %255 = arith.addf %254, %253 : vector<2x32xf32>
    %256 = arith.divf %254, %255 : vector<2x32xf32>
    %257 = vector.extract_strided_slice %244 {offsets = [0, 64], sizes = [2, 32], strides = [1, 1]} : vector<2x128xf32> to vector<2x32xf32>
    %258 = math.tanh %257 : vector<2x32xf32>
    %259 = vector.extract_strided_slice %244 {offsets = [0, 96], sizes = [2, 32], strides = [1, 1]} : vector<2x128xf32> to vector<2x32xf32>
    %260 = arith.negf %259 : vector<2x32xf32>
    %261 = math.exp %260 : vector<2x32xf32>
    %cst_96 = arith.constant 1.000000e+00 : f32
    %262 = vector.broadcast %cst_96 : f32 to vector<2x32xf32>
    %263 = arith.addf %262, %261 : vector<2x32xf32>
    %264 = arith.divf %262, %263 : vector<2x32xf32>
    %265 = arith.mulf %256, %230 : vector<2x32xf32>
    %266 = arith.mulf %250, %258 : vector<2x32xf32>
    %267 = arith.addf %265, %266 : vector<2x32xf32>
    %268 = math.tanh %267 : vector<2x32xf32>
    %269 = arith.mulf %264, %268 : vector<2x32xf32>
    %c0_97 = arith.constant 0 : index
    %270 = arith.index_cast %239 : i32 to index
    %c0_98 = arith.constant 0 : index
    %c0_99 = arith.constant 0 : index
    %271 = vector.load %arg8[%c0_97, %270, %c0_98, %c0_99] : memref<1x8x2x32xf32, #tpu.memory_space<vmem>>, vector<1x1x2x32xf32>
    %272 = vector.shape_cast %271 : vector<1x1x2x32xf32> to vector<2x32xf32>
    %273 = vector.shape_cast %269 : vector<2x32xf32> to vector<1x1x2x32xf32>
    tpu.vector_store %arg8[%c0_97, %270, %c0_98, %c0_99], %273 {strides = array<i32>} : memref<1x8x2x32xf32, #tpu.memory_space<vmem>>, vector<1x1x2x32xf32>,
    %c6_i32 = arith.constant 6 : i32
    %c0_i32_100 = arith.constant 0 : i32
    %274 = arith.cmpi eq, %arg0, %c0_i32_100 : i32
    %c7_i32_101 = arith.constant 7 : i32
    %275 = arith.subi %c7_i32_101, %c6_i32 : i32
    %276 = arith.select %274, %c6_i32, %275 : i32
    %277 = arith.index_cast %276 : i32 to index
    %c0_102 = arith.constant 0 : index
    %c0_103 = arith.constant 0 : index
    %278 = vector.load %arg13[%277, %c0_102, %c0_103] : memref<8x2x128xf32, #tpu.memory_space<vmem>>, vector<1x2x128xf32>
    %279 = vector.shape_cast %278 : vector<1x2x128xf32> to vector<2x128xf32>
    %cst_104 = arith.constant dense<0.000000e+00> : vector<2x128xf32>
    %280 = tpu.matmul %269, %45, %cst_104 {dimension_numbers = #tpu.dot_dimension_numbers<[1], [0], [0], [1], [0, 0, 1, 1], [], []>} : vector<2x32xf32>, vector<32x128xf32>, vector<2x128xf32> -> vector<2x128xf32>
    %281 = arith.addf %279, %280 : vector<2x128xf32>
    %282 = vector.extract_strided_slice %281 {offsets = [0, 0], sizes = [2, 32], strides = [1, 1]} : vector<2x128xf32> to vector<2x32xf32>
    %283 = arith.negf %282 : vector<2x32xf32>
    %284 = math.exp %283 : vector<2x32xf32>
    %cst_105 = arith.constant 1.000000e+00 : f32
    %285 = vector.broadcast %cst_105 : f32 to vector<2x32xf32>
    %286 = arith.addf %285, %284 : vector<2x32xf32>
    %287 = arith.divf %285, %286 : vector<2x32xf32>
    %288 = vector.extract_strided_slice %281 {offsets = [0, 32], sizes = [2, 32], strides = [1, 1]} : vector<2x128xf32> to vector<2x32xf32>
    %289 = arith.negf %288 : vector<2x32xf32>
    %290 = math.exp %289 : vector<2x32xf32>
    %cst_106 = arith.constant 1.000000e+00 : f32
    %291 = vector.broadcast %cst_106 : f32 to vector<2x32xf32>
    %292 = arith.addf %291, %290 : vector<2x32xf32>
    %293 = arith.divf %291, %292 : vector<2x32xf32>
    %294 = vector.extract_strided_slice %281 {offsets = [0, 64], sizes = [2, 32], strides = [1, 1]} : vector<2x128xf32> to vector<2x32xf32>
    %295 = math.tanh %294 : vector<2x32xf32>
    %296 = vector.extract_strided_slice %281 {offsets = [0, 96], sizes = [2, 32], strides = [1, 1]} : vector<2x128xf32> to vector<2x32xf32>
    %297 = arith.negf %296 : vector<2x32xf32>
    %298 = math.exp %297 : vector<2x32xf32>
    %cst_107 = arith.constant 1.000000e+00 : f32
    %299 = vector.broadcast %cst_107 : f32 to vector<2x32xf32>
    %300 = arith.addf %299, %298 : vector<2x32xf32>
    %301 = arith.divf %299, %300 : vector<2x32xf32>
    %302 = arith.mulf %293, %267 : vector<2x32xf32>
    %303 = arith.mulf %287, %295 : vector<2x32xf32>
    %304 = arith.addf %302, %303 : vector<2x32xf32>
    %305 = math.tanh %304 : vector<2x32xf32>
    %306 = arith.mulf %301, %305 : vector<2x32xf32>
    %c0_108 = arith.constant 0 : index
    %307 = arith.index_cast %276 : i32 to index
    %c0_109 = arith.constant 0 : index
    %c0_110 = arith.constant 0 : index
    %308 = vector.load %arg8[%c0_108, %307, %c0_109, %c0_110] : memref<1x8x2x32xf32, #tpu.memory_space<vmem>>, vector<1x1x2x32xf32>
    %309 = vector.shape_cast %308 : vector<1x1x2x32xf32> to vector<2x32xf32>
    %310 = vector.shape_cast %306 : vector<2x32xf32> to vector<1x1x2x32xf32>
    tpu.vector_store %arg8[%c0_108, %307, %c0_109, %c0_110], %310 {strides = array<i32>} : memref<1x8x2x32xf32, #tpu.memory_space<vmem>>, vector<1x1x2x32xf32>,
    %c7_i32_111 = arith.constant 7 : i32
    %c0_i32_112 = arith.constant 0 : i32
    %311 = arith.cmpi eq, %arg0, %c0_i32_112 : i32
    %c7_i32_113 = arith.constant 7 : i32
    %312 = arith.subi %c7_i32_113, %c7_i32_111 : i32
    %313 = arith.select %311, %c7_i32_111, %312 : i32
    %314 = arith.index_cast %313 : i32 to index
    %c0_114 = arith.constant 0 : index
    %c0_115 = arith.constant 0 : index
    %315 = vector.load %arg13[%314, %c0_114, %c0_115] : memref<8x2x128xf32, #tpu.memory_space<vmem>>, vector<1x2x128xf32>
    %316 = vector.shape_cast %315 : vector<1x2x128xf32> to vector<2x128xf32>
    %cst_116 = arith.constant dense<0.000000e+00> : vector<2x128xf32>
    %317 = tpu.matmul %306, %45, %cst_116 {dimension_numbers = #tpu.dot_dimension_numbers<[1], [0], [0], [1], [0, 0, 1, 1], [], []>} : vector<2x32xf32>, vector<32x128xf32>, vector<2x128xf32> -> vector<2x128xf32>
    %318 = arith.addf %316, %317 : vector<2x128xf32>
    %319 = vector.extract_strided_slice %318 {offsets = [0, 0], sizes = [2, 32], strides = [1, 1]} : vector<2x128xf32> to vector<2x32xf32>
    %320 = arith.negf %319 : vector<2x32xf32>
    %321 = math.exp %320 : vector<2x32xf32>
    %cst_117 = arith.constant 1.000000e+00 : f32
    %322 = vector.broadcast %cst_117 : f32 to vector<2x32xf32>
    %323 = arith.addf %322, %321 : vector<2x32xf32>
    %324 = arith.divf %322, %323 : vector<2x32xf32>
    %325 = vector.extract_strided_slice %318 {offsets = [0, 32], sizes = [2, 32], strides = [1, 1]} : vector<2x128xf32> to vector<2x32xf32>
    %326 = arith.negf %325 : vector<2x32xf32>
    %327 = math.exp %326 : vector<2x32xf32>
    %cst_118 = arith.constant 1.000000e+00 : f32
    %328 = vector.broadcast %cst_118 : f32 to vector<2x32xf32>
    %329 = arith.addf %328, %327 : vector<2x32xf32>
    %330 = arith.divf %328, %329 : vector<2x32xf32>
    %331 = vector.extract_strided_slice %318 {offsets = [0, 64], sizes = [2, 32], strides = [1, 1]} : vector<2x128xf32> to vector<2x32xf32>
    %332 = math.tanh %331 : vector<2x32xf32>
    %333 = vector.extract_strided_slice %318 {offsets = [0, 96], sizes = [2, 32], strides = [1, 1]} : vector<2x128xf32> to vector<2x32xf32>
    %334 = arith.negf %333 : vector<2x32xf32>
    %335 = math.exp %334 : vector<2x32xf32>
    %cst_119 = arith.constant 1.000000e+00 : f32
    %336 = vector.broadcast %cst_119 : f32 to vector<2x32xf32>
    %337 = arith.addf %336, %335 : vector<2x32xf32>
    %338 = arith.divf %336, %337 : vector<2x32xf32>
    %339 = arith.mulf %330, %304 : vector<2x32xf32>
    %340 = arith.mulf %324, %332 : vector<2x32xf32>
    %341 = arith.addf %339, %340 : vector<2x32xf32>
    %342 = math.tanh %341 : vector<2x32xf32>
    %343 = arith.mulf %338, %342 : vector<2x32xf32>
    %c0_120 = arith.constant 0 : index
    %344 = arith.index_cast %313 : i32 to index
    %c0_121 = arith.constant 0 : index
    %c0_122 = arith.constant 0 : index
    %345 = vector.load %arg8[%c0_120, %344, %c0_121, %c0_122] : memref<1x8x2x32xf32, #tpu.memory_space<vmem>>, vector<1x1x2x32xf32>
    %346 = vector.shape_cast %345 : vector<1x1x2x32xf32> to vector<2x32xf32>
    %347 = vector.shape_cast %343 : vector<2x32xf32> to vector<1x1x2x32xf32>
    tpu.vector_store %arg8[%c0_120, %344, %c0_121, %c0_122], %347 {strides = array<i32>} : memref<1x8x2x32xf32, #tpu.memory_space<vmem>>, vector<1x1x2x32xf32>,
    %c8_i32 = arith.constant 8 : i32
    %348 = arith.index_cast %arg0 : i32 to index
    %c0_123 = arith.constant 0 : index
    %c0_124 = arith.constant 0 : index
    %349 = vector.load %arg11[%348, %c0_123, %c0_124] : memref<2x2x32xf32, #tpu.memory_space<vmem>>, vector<1x2x32xf32>
    %350 = vector.shape_cast %349 : vector<1x2x32xf32> to vector<2x32xf32>
    %351 = vector.shape_cast %343 : vector<2x32xf32> to vector<1x2x32xf32>
    tpu.vector_store %arg11[%348, %c0_123, %c0_124], %351 {strides = array<i32>} : memref<2x2x32xf32, #tpu.memory_space<vmem>>, vector<1x2x32xf32>,
    %352 = arith.index_cast %arg0 : i32 to index
    %c0_125 = arith.constant 0 : index
    %c0_126 = arith.constant 0 : index
    %353 = vector.load %arg12[%352, %c0_125, %c0_126] : memref<2x2x32xf32, #tpu.memory_space<vmem>>, vector<1x2x32xf32>
    %354 = vector.shape_cast %353 : vector<1x2x32xf32> to vector<2x32xf32>
    %355 = vector.shape_cast %341 : vector<2x32xf32> to vector<1x2x32xf32>
    tpu.vector_store %arg12[%352, %c0_125, %c0_126], %355 {strides = array<i32>} : memref<2x2x32xf32, #tpu.memory_space<vmem>>, vector<1x2x32xf32>,
    %c0_i32_127 = arith.constant 0 : i32
    %356 = arith.cmpi eq, %arg1, %c0_i32_127 : i32
    %357 = arith.extui %356 : i1 to i32
    %c0_i32_128 = arith.constant 0 : i32
    %358 = arith.cmpi ne, %357, %c0_i32_128 : i32
    scf.if %358 {
      %c0_129 = arith.constant 0 : index
      %c0_130 = arith.constant 0 : index
      %c0_131 = arith.constant 0 : index
      %359 = vector.load %arg9[%c0_129, %c0_130, %c0_131] : memref<1x2x32xf32, #tpu.memory_space<vmem>>, vector<1x2x32xf32>
      %360 = vector.shape_cast %359 : vector<1x2x32xf32> to vector<2x32xf32>
      %361 = vector.shape_cast %343 : vector<2x32xf32> to vector<1x2x32xf32>
      tpu.vector_store %arg9[%c0_129, %c0_130, %c0_131], %361 {strides = array<i32>} : memref<1x2x32xf32, #tpu.memory_space<vmem>>, vector<1x2x32xf32>,
      %c0_132 = arith.constant 0 : index
      %c0_133 = arith.constant 0 : index
      %c0_134 = arith.constant 0 : index
      %362 = vector.load %arg10[%c0_132, %c0_133, %c0_134] : memref<1x2x32xf32, #tpu.memory_space<vmem>>, vector<1x2x32xf32>
      %363 = vector.shape_cast %362 : vector<1x2x32xf32> to vector<2x32xf32>
      %364 = vector.shape_cast %341 : vector<2x32xf32> to vector<1x2x32xf32>
      tpu.vector_store %arg10[%c0_132, %c0_133, %c0_134], %364 {strides = array<i32>} : memref<1x2x32xf32, #tpu.memory_space<vmem>>, vector<1x2x32xf32>,
    } else {
    }
    return
  }
  func.func @transform_0(%arg0: i32, %arg1: i32) -> (i32, i32, i32) {
    %c1_i32 = arith.constant 1 : i32
    %0 = arith.subi %c1_i32, %arg0 : i32
    %1 = arith.muli %arg1, %0 : i32
    %c0_i32 = arith.constant 0 : i32
    %2 = arith.subi %c0_i32, %arg1 : i32
    %3 = arith.muli %2, %arg0 : i32
    %4 = arith.addi %1, %3 : i32
    %c0_i32_0 = arith.constant 0 : i32
    %c0_i32_1 = arith.constant 0 : i32
    %c0_i32_2 = arith.constant 0 : i32
    return %c0_i32_0, %4, %c0_i32_1 : i32, i32, i32
  }
  func.func @transform_1(%arg0: i32, %arg1: i32) -> (i32, i32, i32, i32) {
    %c0_i32 = arith.constant 0 : i32
    %c0_i32_0 = arith.constant 0 : i32
    %c0_i32_1 = arith.constant 0 : i32
    %c0_i32_2 = arith.constant 0 : i32
    return %arg0, %c0_i32, %c0_i32_0, %c0_i32_1 : i32, i32, i32, i32
  }
  func.func @transform_2(%arg0: i32, %arg1: i32) -> (i32, i32, i32) {
    %c0_i32 = arith.constant 0 : i32
    %c0_i32_0 = arith.constant 0 : i32
    %c0_i32_1 = arith.constant 0 : i32
    return %arg0, %c0_i32, %c0_i32_0 : i32, i32, i32
  }
  func.func @transform_3(%arg0: i32, %arg1: i32) -> (i32, i32, i32) {
    %c0_i32 = arith.constant 0 : i32
    %c0_i32_0 = arith.constant 0 : i32
    %c0_i32_1 = arith.constant 0 : i32
    return %arg0, %c0_i32, %c0_i32_0 : i32, i32, i32
  }
  func.func @transform_4(%arg0: i32, %arg1: i32) -> (i32, i32, i32) {
    %c0_i32 = arith.constant 0 : i32
    %c0_i32_0 = arith.constant 0 : i32
    %c0_i32_1 = arith.constant 0 : i32
    return %arg0, %c0_i32, %c0_i32_0 : i32, i32, i32
  }
  func.func @transform_5(%arg0: i32, %arg1: i32) -> (i32, i32, i32) {
    %c0_i32 = arith.constant 0 : i32
    %c0_i32_0 = arith.constant 0 : i32
    %c0_i32_1 = arith.constant 0 : i32
    return %arg0, %c0_i32, %c0_i32_0 : i32, i32, i32
  }
  func.func @transform_6(%arg0: i32, %arg1: i32) -> (i32, i32, i32, i32) {
    %c1_i32 = arith.constant 1 : i32
    %0 = arith.subi %c1_i32, %arg0 : i32
    %1 = arith.muli %arg1, %0 : i32
    %c0_i32 = arith.constant 0 : i32
    %2 = arith.subi %c0_i32, %arg1 : i32
    %3 = arith.muli %2, %arg0 : i32
    %4 = arith.addi %1, %3 : i32
    %c0_i32_0 = arith.constant 0 : i32
    %c0_i32_1 = arith.constant 0 : i32
    %c0_i32_2 = arith.constant 0 : i32
    return %arg0, %4, %c0_i32_0, %c0_i32_1 : i32, i32, i32, i32
  }
  func.func @transform_7(%arg0: i32, %arg1: i32) -> (i32, i32, i32) {
    %c0_i32 = arith.constant 0 : i32
    %c0_i32_0 = arith.constant 0 : i32
    %c0_i32_1 = arith.constant 0 : i32
    return %arg0, %c0_i32, %c0_i32_0 : i32, i32, i32
  }
  func.func @transform_8(%arg0: i32, %arg1: i32) -> (i32, i32, i32) {
    %c0_i32 = arith.constant 0 : i32
    %c0_i32_0 = arith.constant 0 : i32
    %c0_i32_1 = arith.constant 0 : i32
    return %arg0, %c0_i32, %c0_i32_0 : i32, i32, i32
  }
}

</mosaic_0001>

<llo_original>
// kernel: tpu_custom_call.1
$region0: #{tpu_custom_call.1}
  #allocation0 [shape = 'u32[]', space=smem, size = 0x4, offset = 0x4, fixed_abs, tag = 'smem constant byte address 0x4 - core index']
  #allocation1 [shape = 'u32[72,128]{1,0:T(1,128)}', space=vmem, size = 0x9000, scoped, tag = 'internal scratch']
  #allocation2 [shape = 'f32[2,2,32]{2,1,0:T(2,128)}', space=vmem, size = 0x800, scoped, tag = 'scratch operand']
  #allocation3 [shape = 'f32[2,2,32]{2,1,0:T(2,128)}', space=vmem, size = 0x800, scoped, tag = 'scratch operand']
  #allocation4 [shape = 'f32[8,2,128]{2,1,0:T(2,128)}', space=vmem, size = 0x2000, scoped, tag = 'scratch operand']
  %s0 = inlined_call_operand.hbm [shape: f32[1,16,32], index: 0, kind: input, shape index: {}]
  %s1 = inlined_call_operand.hbm [shape: f32[2,1,32,128], index: 1, kind: input, shape index: {}]
  %s2 = inlined_call_operand.hbm [shape: f32[2,32,128], index: 2, kind: input, shape index: {}]
  %s3 = inlined_call_operand.hbm [shape: f32[2,1,128], index: 3, kind: input, shape index: {}]
  %s4 = inlined_call_operand.hbm [shape: f32[2,2,32], index: 4, kind: input, shape index: {}]
  %s5 = inlined_call_operand.vmem [shape: f32[2,2,32], index: 5, kind: input, shape index: {}]
  %s6 = inlined_call_operand.hbm [shape: f32[2,8,2,32], index: 6, kind: output, shape index: {0}]
  %s7 = inlined_call_operand.hbm [shape: f32[2,2,32], index: 7, kind: output, shape index: {1}]
  %s8 = inlined_call_operand.hbm [shape: f32[2,2,32], index: 8, kind: output, shape index: {2}]
  %9 = xla_tuple %s6, %s7, %s8
  %s10 = sld [smem:[#allocation0]]
  $region101: #{tpu_custom_call.1} parent=0
    _
  %s12 = ssub.s32 1, %s10
  %s13 = scalar_select 0, %s12, %s10
  $region1: #{tpu_custom_call.1} parent=0
    #allocation5 [shape = 'u8[16384]{0}', space=vmem, size = 0x4000, scoped, tag = 'input window, operand 0']
    #allocation6 [shape = 's32[2]{0}', space=sflag, size = 0x8, scoped, tag = 'scoped memory for tpu_custom_call.1']
    #allocation7 [shape = 's32[2]{0}', space=sflag, size = 0x8, scoped, tag = 'scoped memory for tpu_custom_call.1']
    #allocation8 [shape = 'u8[32768]{0}', space=vmem, size = 0x8000, scoped, tag = 'input window, operand 1']
    #allocation9 [shape = 's32[2]{0}', space=sflag, size = 0x8, scoped, tag = 'scoped memory for tpu_custom_call.1']
    #allocation10 [shape = 'u8[32768]{0}', space=vmem, size = 0x8000, scoped, tag = 'input window, operand 2']
    #allocation11 [shape = 'u8[1024]{0}', space=vmem, size = 0x400, scoped, tag = 'input window, operand 3']
    #allocation12 [shape = 's32[2]{0}', space=sflag, size = 0x8, scoped, tag = 'scoped memory for tpu_custom_call.1']
    #allocation13 [shape = 'u8[2048]{0}', space=vmem, size = 0x800, scoped, tag = 'input window, operand 4']
    #allocation14 [shape = 'u8[16384]{0}', space=vmem, size = 0x4000, scoped, tag = 'output window, operand 0']
    #allocation15 [shape = 'u8[2048]{0}', space=vmem, size = 0x800, scoped, tag = 'output window, operand 1']
    #allocation16 [shape = 's32[2]{0}', space=sflag, size = 0x8, scoped, tag = 'scoped memory for tpu_custom_call.1']
    #allocation17 [shape = 'u8[2048]{0}', space=vmem, size = 0x800, scoped, tag = 'output window, operand 2']
    %14 = vsyncpa [#allocation6], 0
    %s15 = scalar_lea.sflag [#allocation6], 1
    %16 = vsyncpa %s15, 0
    %17 = vsyncpa [#allocation9], 0
    %s18 = scalar_lea.sflag [#allocation9], 1
    %19 = vsyncpa %s18, 0
    %20 = vsyncpa [#allocation12], 0
    %s21 = scalar_lea.sflag [#allocation12], 1
    %22 = vsyncpa %s21, 0
    %23 = vsyncpa [#allocation7], 0
    %s24 = scalar_lea.sflag [#allocation7], 1
    %25 = vsyncpa %s24, 0
    %26 = vsyncpa [#allocation16], 0
    %s27 = scalar_lea.sflag [#allocation16], 1
    %28 = vsyncpa %s27, 0
    loop: start=0, step=1, limit=4
    $region2: #{tpu_custom_call.1} parent=1 // loop_pre_header
      _
    $region3: #{tpu_custom_call.1} parent=1 // loop_header
      %s30 = sphi 0, %s34
      %p31 = scmp.ge.s32.totalorder %s30, 4
      %s37 = sphi 0, %s49
      %s38 = sphi 0, %s45
      %s39 = sphi 0, %s37
      %s40 = sphi 0, %s38
      %s41 = sphi 0, %s39
      %s42 = sphi 0, %s40
      %s62 = sphi 0, %s64
      %s65 = sphi 0, %s62
      %s66 = sphi 0, %s65
      %s82 = sphi 0, %s66
      %s88 = sphi 0, %s90
      %s91 = sphi 0, %s88
      %s92 = sphi 0, %s91
      %s108 = sphi 0, %s92
      %s114 = sphi 0, %s116
      %s117 = sphi 0, %s114
      %s118 = sphi 0, %s117
      %s134 = sphi 0, %s118
      %s140 = sphi 0, %s142
      %s143 = sphi 0, %s140
      %s144 = sphi 0, %s143
      %s160 = sphi 0, %s144
      %s166 = sphi 0, %s168
      %s169 = sphi 0, %s166
      %s170 = sphi 0, %s169
      %s186 = sphi 0, %s170
      %s192 = sphi 0, %s194
      %s195 = sphi 0, %s192
      %s196 = sphi 0, %s195
      %s212 = sphi 0, %s196
      %s230 = sphi 0, %s232
      %s233 = sphi 0, %s230
      %s234 = sphi 0, %s233
      %s250 = sphi 0, %s234
      %s256 = sphi 0, %s258
      %s259 = sphi 0, %s256
      %s260 = sphi 0, %s259
      %s276 = sphi 0, %s260
      %s282 = sphi 0, %s284
      %s285 = sphi 0, %s282
      %s286 = sphi 0, %s285
      %s302 = sphi 0, %s286
    $region4: #{tpu_custom_call.1} parent=1 // loop_header_branch
      %33 = sbr.rel (%p31) target = $region8
    $region5: #{tpu_custom_call.1} parent=1 // loop_body
      %s35 = ssub.s32 %s30, 1
      %s36 = ssub.s32 %s30, 2
      %s43 = sadd.s32 1, %s38
      %p44 = scmp.ge.s32.totalorder %s43, 1
      %s45 = scalar_select %p44, 0, %s43
      %s46 = sadd.s32 1, %s37
      %s47 = scalar_select %p44, %s46, %s37
      %p48 = scmp.ge.s32.totalorder %s47, 2
      %s49 = scalar_select %p48, 0, %s47
      %s50 = ssub.s32 1, %s37
      %s51 = smul.u32 %s38, %s50
      %s52 = ssub.s32 0, %s38
      %s53 = smul.u32 %s52, %s37
      %s54 = sadd.s32 %s51, %s53
      %s55 = ssub.s32 1, %s49
      %s56 = smul.u32 %s45, %s55
      %s57 = ssub.s32 0, %s45
      %s58 = smul.u32 %s57, %s49
      %s59 = sadd.s32 %s56, %s58
      %s60 = ssub.s32 %s54, %s59
      %p61 = scmp.eq.s32.totalorder %s60, 0
      %s63 = sadd.s32 %s62, 1
      %s64 = scalar_select %p61, %s62, %s63
      %p67 = pneg %p61
      %p68 = scmp.eq.s32.totalorder %s30, 1
      %p69 = por %p67, %p68
      %p70 = scmp.ne.s32.totalorder %s62, %s65
      %p71 = scmp.eq.s32.totalorder %s30, 0
      %p72 = por %p70, %p71
      %p73 = scmp.ne.s32.totalorder %s62, %s65
      %p74 = scmp.eq.s32.totalorder %s35, 1
      %p75 = por %p73, %p74
      %p76 = scmp.ne.s32.totalorder %s65, %s66
      %p77 = scmp.eq.s32.totalorder %s35, 0
      %p78 = por %p76, %p77
      %p79 = scmp.ne.s32.totalorder %s65, %s66
      %p80 = scmp.eq.s32.totalorder %s36, 1
      %p81 = por %p79, %p80
      %p83 = scmp.ne.s32.totalorder %s66, %s82
      %p84 = scmp.eq.s32.totalorder %s36, 0
      %p85 = por %p83, %p84
      %s86 = ssub.s32 %s37, %s49
      %p87 = scmp.eq.s32.totalorder %s86, 0
      %s89 = sadd.s32 %s88, 1
      %s90 = scalar_select %p87, %s88, %s89
      %p93 = pneg %p87
      %p94 = scmp.eq.s32.totalorder %s30, 1
      %p95 = por %p93, %p94
      %p96 = scmp.ne.s32.totalorder %s88, %s91
      %p97 = scmp.eq.s32.totalorder %s30, 0
      %p98 = por %p96, %p97
      %p99 = scmp.ne.s32.totalorder %s88, %s91
      %p100 = scmp.eq.s32.totalorder %s35, 1
      %p101 = por %p99, %p100
      %p102 = scmp.ne.s32.totalorder %s91, %s92
      %p103 = scmp.eq.s32.totalorder %s35, 0
      %p104 = por %p102, %p103
      %p105 = scmp.ne.s32.totalorder %s91, %s92
      %p106 = scmp.eq.s32.totalorder %s36, 1
      %p107 = por %p105, %p106
      %p109 = scmp.ne.s32.totalorder %s92, %s108
      %p110 = scmp.eq.s32.totalorder %s36, 0
      %p111 = por %p109, %p110
      %s112 = ssub.s32 %s37, %s49
      %p113 = scmp.eq.s32.totalorder %s112, 0
      %s115 = sadd.s32 %s114, 1
      %s116 = scalar_select %p113, %s114, %s115
      %p119 = pneg %p113
      %p120 = scmp.eq.s32.totalorder %s30, 1
      %p121 = por %p119, %p120
      %p122 = scmp.ne.s32.totalorder %s114, %s117
      %p123 = scmp.eq.s32.totalorder %s30, 0
      %p124 = por %p122, %p123
      %p125 = scmp.ne.s32.totalorder %s114, %s117
      %p126 = scmp.eq.s32.totalorder %s35, 1
      %p127 = por %p125, %p126
      %p128 = scmp.ne.s32.totalorder %s117, %s118
      %p129 = scmp.eq.s32.totalorder %s35, 0
      %p130 = por %p128, %p129
      %p131 = scmp.ne.s32.totalorder %s117, %s118
      %p132 = scmp.eq.s32.totalorder %s36, 1
      %p133 = por %p131, %p132
      %p135 = scmp.ne.s32.totalorder %s118, %s134
      %p136 = scmp.eq.s32.totalorder %s36, 0
      %p137 = por %p135, %p136
      %s138 = ssub.s32 %s37, %s49
      %p139 = scmp.eq.s32.totalorder %s138, 0
      %s141 = sadd.s32 %s140, 1
      %s142 = scalar_select %p139, %s140, %s141
      %p145 = pneg %p139
      %p146 = scmp.eq.s32.totalorder %s30, 1
      %p147 = por %p145, %p146
      %p148 = scmp.ne.s32.totalorder %s140, %s143
      %p149 = scmp.eq.s32.totalorder %s30, 0
      %p150 = por %p148, %p149
      %p151 = scmp.ne.s32.totalorder %s140, %s143
      %p152 = scmp.eq.s32.totalorder %s35, 1
      %p153 = por %p151, %p152
      %p154 = scmp.ne.s32.totalorder %s143, %s144
      %p155 = scmp.eq.s32.totalorder %s35, 0
      %p156 = por %p154, %p155
      %p157 = scmp.ne.s32.totalorder %s143, %s144
      %p158 = scmp.eq.s32.totalorder %s36, 1
      %p159 = por %p157, %p158
      %p161 = scmp.ne.s32.totalorder %s144, %s160
      %p162 = scmp.eq.s32.totalorder %s36, 0
      %p163 = por %p161, %p162
      %s164 = ssub.s32 %s37, %s49
      %p165 = scmp.eq.s32.totalorder %s164, 0
      %s167 = sadd.s32 %s166, 1
      %s168 = scalar_select %p165, %s166, %s167
      %p171 = pneg %p165
      %p172 = scmp.eq.s32.totalorder %s30, 1
      %p173 = por %p171, %p172
      %p174 = scmp.ne.s32.totalorder %s166, %s169
      %p175 = scmp.eq.s32.totalorder %s30, 0
      %p176 = por %p174, %p175
      %p177 = scmp.ne.s32.totalorder %s166, %s169
      %p178 = scmp.eq.s32.totalorder %s35, 1
      %p179 = por %p177, %p178
      %p180 = scmp.ne.s32.totalorder %s169, %s170
      %p181 = scmp.eq.s32.totalorder %s35, 0
      %p182 = por %p180, %p181
      %p183 = scmp.ne.s32.totalorder %s169, %s170
      %p184 = scmp.eq.s32.totalorder %s36, 1
      %p185 = por %p183, %p184
      %p187 = scmp.ne.s32.totalorder %s170, %s186
      %p188 = scmp.eq.s32.totalorder %s36, 0
      %p189 = por %p187, %p188
      %s190 = ssub.s32 %s37, %s49
      %p191 = scmp.eq.s32.totalorder %s190, 0
      %s193 = sadd.s32 %s192, 1
      %s194 = scalar_select %p191, %s192, %s193
      %p197 = pneg %p191
      %p198 = scmp.eq.s32.totalorder %s30, 1
      %p199 = por %p197, %p198
      %p200 = scmp.ne.s32.totalorder %s192, %s195
      %p201 = scmp.eq.s32.totalorder %s30, 0
      %p202 = por %p200, %p201
      %p203 = scmp.ne.s32.totalorder %s192, %s195
      %p204 = scmp.eq.s32.totalorder %s35, 1
      %p205 = por %p203, %p204
      %p206 = scmp.ne.s32.totalorder %s195, %s196
      %p207 = scmp.eq.s32.totalorder %s35, 0
      %p208 = por %p206, %p207
      %p209 = scmp.ne.s32.totalorder %s195, %s196
      %p210 = scmp.eq.s32.totalorder %s36, 1
      %p211 = por %p209, %p210
      %p213 = scmp.ne.s32.totalorder %s196, %s212
      %p214 = scmp.eq.s32.totalorder %s36, 0
      %p215 = por %p213, %p214
      %s216 = ssub.s32 1, %s37
      %s217 = smul.u32 %s38, %s216
      %s218 = ssub.s32 0, %s38
      %s219 = smul.u32 %s218, %s37
      %s220 = sadd.s32 %s217, %s219
      %s221 = ssub.s32 1, %s49
      %s222 = smul.u32 %s45, %s221
      %s223 = ssub.s32 0, %s45
      %s224 = smul.u32 %s223, %s49
      %s225 = sadd.s32 %s222, %s224
      %s226 = ssub.s32 %s37, %s49
      %s227 = ssub.s32 %s220, %s225
      %s228 = sor.u32 %s226, %s227
      %p229 = scmp.eq.s32.totalorder %s228, 0
      %s231 = sadd.s32 %s230, 1
      %s232 = scalar_select %p229, %s230, %s231
      %p235 = pneg %p229
      %p236 = scmp.eq.s32.totalorder %s30, 1
      %p237 = por %p235, %p236
      %p238 = scmp.ne.s32.totalorder %s230, %s233
      %p239 = scmp.eq.s32.totalorder %s30, 0
      %p240 = por %p238, %p239
      %p241 = scmp.ne.s32.totalorder %s230, %s233
      %p242 = scmp.eq.s32.totalorder %s35, 1
      %p243 = por %p241, %p242
      %p244 = scmp.ne.s32.totalorder %s233, %s234
      %p245 = scmp.eq.s32.totalorder %s35, 0
      %p246 = por %p244, %p245
      %p247 = scmp.ne.s32.totalorder %s233, %s234
      %p248 = scmp.eq.s32.totalorder %s36, 1
      %p249 = por %p247, %p248
      %p251 = scmp.ne.s32.totalorder %s234, %s250
      %p252 = scmp.eq.s32.totalorder %s36, 0
      %p253 = por %p251, %p252
      %s254 = ssub.s32 %s37, %s49
      %p255 = scmp.eq.s32.totalorder %s254, 0
      %s257 = sadd.s32 %s256, 1
      %s258 = scalar_select %p255, %s256, %s257
      %p261 = pneg %p255
      %p262 = scmp.eq.s32.totalorder %s30, 1
      %p263 = por %p261, %p262
      %p264 = scmp.ne.s32.totalorder %s256, %s259
      %p265 = scmp.eq.s32.totalorder %s30, 0
      %p266 = por %p264, %p265
      %p267 = scmp.ne.s32.totalorder %s256, %s259
      %p268 = scmp.eq.s32.totalorder %s35, 1
      %p269 = por %p267, %p268
      %p270 = scmp.ne.s32.totalorder %s259, %s260
      %p271 = scmp.eq.s32.totalorder %s35, 0
      %p272 = por %p270, %p271
      %p273 = scmp.ne.s32.totalorder %s259, %s260
      %p274 = scmp.eq.s32.totalorder %s36, 1
      %p275 = por %p273, %p274
      %p277 = scmp.ne.s32.totalorder %s260, %s276
      %p278 = scmp.eq.s32.totalorder %s36, 0
      %p279 = por %p277, %p278
      %s280 = ssub.s32 %s37, %s49
      %p281 = scmp.eq.s32.totalorder %s280, 0
      %s283 = sadd.s32 %s282, 1
      %s284 = scalar_select %p281, %s282, %s283
      %p287 = pneg %p281
      %p288 = scmp.eq.s32.totalorder %s30, 1
      %p289 = por %p287, %p288
      %p290 = scmp.ne.s32.totalorder %s282, %s285
      %p291 = scmp.eq.s32.totalorder %s30, 0
      %p292 = por %p290, %p291
      %p293 = scmp.ne.s32.totalorder %s282, %s285
      %p294 = scmp.eq.s32.totalorder %s35, 1
      %p295 = por %p293, %p294
      %p296 = scmp.ne.s32.totalorder %s285, %s286
      %p297 = scmp.eq.s32.totalorder %s35, 0
      %p298 = por %p296, %p297
      %p299 = scmp.ne.s32.totalorder %s285, %s286
      %p300 = scmp.eq.s32.totalorder %s36, 1
      %p301 = por %p299, %p300
      %p303 = scmp.ne.s32.totalorder %s286, %s302
      %p304 = scmp.eq.s32.totalorder %s36, 0
      %p305 = por %p303, %p304
      %p306 = scmp.le.s32.totalorder 1, %s30
      %p307 = scmp.lt.s32.totalorder %s30, 3
      %p308 = pnand %p306, %p307
      %p309 = pneg %p308
      // Predicated region
      $region9: #{tpu_custom_call.1} parent=5 // pred_check
        _
      $region10: #{tpu_custom_call.1} parent=5 // pred_check_branch
        %311 = sbr.rel (%p308) target = $region12
      $region11: #{tpu_custom_call.1} parent=5 // pred_region
        %s312 = ssub.s32 %s30, 1
      $region12: #{tpu_custom_call.1} parent=5 // pred_fallthru
        _
      %p313 = scmp.lt.s32.totalorder %s30, 2
      // Predicated region
      $region13: #{tpu_custom_call.1} parent=5 // pred_check
        %p314 = pneg %p313
      $region14: #{tpu_custom_call.1} parent=5 // pred_check_branch
        %316 = sbr.rel (%p314) target = $region16
      $region15: #{tpu_custom_call.1} parent=5 // pred_region
        // Predicated region
        $region17: #{tpu_custom_call.1} parent=15 // pred_check
          %p317 = pneg %p72
        $region18: #{tpu_custom_call.1} parent=15 // pred_check_branch
          %319 = sbr.rel (%p317) target = $region20
        $region19: #{tpu_custom_call.1} parent=15 // pred_region
          %s320 = sand.u32 %s62, 1
          %s321 = scalar_lea.sflag [#allocation6], %s320
          %s322 = sand.u32 %s62, 1
          %s323 = smul.addr %s322, 16
          %s324 = scalar_lea.vmem [#allocation5], %s323
          %s325 = ssub.s32 1, %s37
          %s326 = smul.u32 %s38, %s325
          %s327 = ssub.s32 0, %s38
          %s328 = smul.u32 %s327, %s37
          %s329 = sadd.s32 %s326, %s328
          %s330 = smul.u32 2, %s329
          %332 = vsyncadd %s321, 0
          %s333 = smul.addr %s330, 8
          %s334 = scalar_lea.hbm %s0, %s333
          %s335 = sshll.u32 %s334, 4
          %s336 = int_to_ptr.hbm [resolvable:$true] %s335
          %s337 = sshll.u32 %s324, 4
          %s338 = int_to_ptr.vmem [resolvable:$true] %s337
          %343 = dma.hbm_to_vmem [thread:$0]  %s336, 256, %s338, %s321, 128, 128, 8
        $region20: #{tpu_custom_call.1} parent=15 // pred_fallthru
          _
        // Predicated region
        $region21: #{tpu_custom_call.1} parent=15 // pred_check
          %p344 = pneg %p98
        $region22: #{tpu_custom_call.1} parent=15 // pred_check_branch
          %346 = sbr.rel (%p344) target = $region24
        $region23: #{tpu_custom_call.1} parent=15 // pred_region
          %s347 = sand.u32 %s30, 1
          %s348 = scalar_lea.sflag [#allocation9], %s347
          %s349 = sand.u32 %s88, 1
          %s350 = smul.addr %s349, 32
          %s351 = scalar_lea.vmem [#allocation8], %s350
          %353 = vsyncadd %s348, 0
          %s354 = smul.addr %s37, 4
          %s355 = smul.addr %s354, 8
          %s356 = scalar_lea.hbm %s1, %s355
          %s357 = sshll.u32 %s356, 4
          %s358 = int_to_ptr.hbm [resolvable:$true] %s357
          %s359 = sshll.u32 %s351, 4
          %s360 = int_to_ptr.vmem [resolvable:$true] %s359
          %365 = dma.hbm_to_vmem [thread:$0]  %s358, 512, %s360, %s348, 128, 128, 8
        $region24: #{tpu_custom_call.1} parent=15 // pred_fallthru
          _
        // Predicated region
        $region25: #{tpu_custom_call.1} parent=15 // pred_check
          %p366 = pneg %p124
        $region26: #{tpu_custom_call.1} parent=15 // pred_check_branch
          %368 = sbr.rel (%p366) target = $region28
        $region27: #{tpu_custom_call.1} parent=15 // pred_region
          %s369 = sand.u32 %s30, 1
          %s370 = scalar_lea.sflag [#allocation9], %s369
          %s371 = sand.u32 %s114, 1
          %s372 = smul.addr %s371, 32
          %s373 = scalar_lea.vmem [#allocation10], %s372
          %375 = vsyncadd %s370, 0
          %s376 = smul.addr %s37, 4
          %s377 = smul.addr %s376, 8
          %s378 = scalar_lea.hbm %s2, %s377
          %s379 = sshll.u32 %s378, 4
          %s380 = int_to_ptr.hbm [resolvable:$true] %s379
          %s381 = sshll.u32 %s373, 4
          %s382 = int_to_ptr.vmem [resolvable:$true] %s381
          %387 = dma.hbm_to_vmem [thread:$0]  %s380, 512, %s382, %s370, 128, 128, 8
        $region28: #{tpu_custom_call.1} parent=15 // pred_fallthru
          _
        // Predicated region
        $region29: #{tpu_custom_call.1} parent=15 // pred_check
          %p388 = pneg %p150
        $region30: #{tpu_custom_call.1} parent=15 // pred_check_branch
          %390 = sbr.rel (%p388) target = $region32
        $region31: #{tpu_custom_call.1} parent=15 // pred_region
          %s391 = sand.u32 %s30, 1
          %s392 = scalar_lea.sflag [#allocation12], %s391
          %s393 = sand.u32 %s140, 1
          %s394 = scalar_lea.vmem [#allocation11], %s393
          %396 = vsyncadd %s392, 0
          %s397 = scalar_lea.hbm %s3, %s37
          %s399 = sshll.u32 %s397, 4
          %s400 = int_to_ptr.hbm [resolvable:$true] %s399
          %s401 = sshll.u32 %s394, 4
          %s402 = int_to_ptr.vmem [resolvable:$true] %s401
          %404 = dma.hbm_to_vmem [thread:$0]  %s400, 16, %s402, %s392
        $region32: #{tpu_custom_call.1} parent=15 // pred_fallthru
          _
        // Predicated region
        $region33: #{tpu_custom_call.1} parent=15 // pred_check
          %p405 = pneg %p176
        $region34: #{tpu_custom_call.1} parent=15 // pred_check_branch
          %407 = sbr.rel (%p405) target = $region36
        $region35: #{tpu_custom_call.1} parent=15 // pred_region
          %s408 = sand.u32 %s30, 1
          %s409 = scalar_lea.sflag [#allocation12], %s408
          %s410 = sand.u32 %s166, 1
          %s411 = smul.addr %s410, 2
          %s412 = scalar_lea.vmem [#allocation13], %s411
          %414 = vsyncadd %s409, 0
          %s415 = smul.addr %s37, 2
          %s416 = scalar_lea.hbm %s4, %s415
          %s418 = sshll.u32 %s416, 4
          %s419 = int_to_ptr.hbm [resolvable:$true] %s418
          %s420 = sshll.u32 %s412, 4
          %s421 = int_to_ptr.vmem [resolvable:$true] %s420
          %423 = dma.hbm_to_vmem [thread:$0]  %s419, 32, %s421, %s409
        $region36: #{tpu_custom_call.1} parent=15 // pred_fallthru
          _
        // Predicated region
        $region37: #{tpu_custom_call.1} parent=15 // pred_check
          %p424 = pneg %p202
        $region38: #{tpu_custom_call.1} parent=15 // pred_check_branch
          %426 = sbr.rel (%p424) target = $region40
        $region39: #{tpu_custom_call.1} parent=15 // pred_region
          %p427 = scmp.lt.s32.totalorder %s37, 1
          %s428 = scalar_select %p427, %s37, 1
          %s429 = smul.addr %s428, 2
          %s430 = scalar_lea.vmem %s5, %s429
        $region40: #{tpu_custom_call.1} parent=15 // pred_fallthru
          _
      $region16: #{tpu_custom_call.1} parent=5 // pred_fallthru
        _
      %p431 = scmp.le.s32.totalorder 1, %s30
      %p432 = scmp.lt.s32.totalorder %s30, 3
      %p433 = pnand %p431, %p432
      %p434 = pneg %p433
      // Predicated region
      $region41: #{tpu_custom_call.1} parent=5 // pred_check
        _
      $region42: #{tpu_custom_call.1} parent=5 // pred_check_branch
        %436 = sbr.rel (%p433) target = $region44
      $region43: #{tpu_custom_call.1} parent=5 // pred_region
        %s437 = ssub.s32 %s30, 1
        %s438 = sand.u32 %s65, 1
        %s439 = scalar_lea.sflag [#allocation6], %s438
        %s440 = sand.u32 %s65, 1
        %s441 = smul.addr %s440, 16
        %s442 = scalar_lea.vmem [#allocation5], %s441
        // Predicated region
        $region45: #{tpu_custom_call.1} parent=43 // pred_check
          %p443 = pneg %p78
        $region46: #{tpu_custom_call.1} parent=43 // pred_check_branch
          %445 = sbr.rel (%p443) target = $region48
        $region47: #{tpu_custom_call.1} parent=43 // pred_region
          %447 = dma.done %s439, 256
        $region48: #{tpu_custom_call.1} parent=43 // pred_fallthru
          _
        %s448 = sand.u32 %s35, 1
        %s449 = scalar_lea.sflag [#allocation9], %s448
        %s450 = sand.u32 %s91, 1
        %s451 = smul.addr %s450, 32
        %s452 = scalar_lea.vmem [#allocation8], %s451
        // Predicated region
        $region49: #{tpu_custom_call.1} parent=43 // pred_check
          %p453 = pneg %p104
        $region50: #{tpu_custom_call.1} parent=43 // pred_check_branch
          %455 = sbr.rel (%p453) target = $region52
        $region51: #{tpu_custom_call.1} parent=43 // pred_region
          %457 = dma.done %s449, 512
        $region52: #{tpu_custom_call.1} parent=43 // pred_fallthru
          _
        %s458 = sand.u32 %s35, 1
        %s459 = scalar_lea.sflag [#allocation9], %s458
        %s460 = sand.u32 %s117, 1
        %s461 = smul.addr %s460, 32
        %s462 = scalar_lea.vmem [#allocation10], %s461
        // Predicated region
        $region53: #{tpu_custom_call.1} parent=43 // pred_check
          %p463 = pneg %p130
        $region54: #{tpu_custom_call.1} parent=43 // pred_check_branch
          %465 = sbr.rel (%p463) target = $region56
        $region55: #{tpu_custom_call.1} parent=43 // pred_region
          %467 = dma.done %s459, 512
        $region56: #{tpu_custom_call.1} parent=43 // pred_fallthru
          _
        %s468 = sand.u32 %s35, 1
        %s469 = scalar_lea.sflag [#allocation12], %s468
        %s470 = sand.u32 %s143, 1
        %s471 = scalar_lea.vmem [#allocation11], %s470
        // Predicated region
        $region57: #{tpu_custom_call.1} parent=43 // pred_check
          %p472 = pneg %p156
        $region58: #{tpu_custom_call.1} parent=43 // pred_check_branch
          %474 = sbr.rel (%p472) target = $region60
        $region59: #{tpu_custom_call.1} parent=43 // pred_region
          %476 = dma.done %s469, 16
        $region60: #{tpu_custom_call.1} parent=43 // pred_fallthru
          _
        %s477 = sand.u32 %s35, 1
        %s478 = scalar_lea.sflag [#allocation12], %s477
        %s479 = sand.u32 %s169, 1
        %s480 = smul.addr %s479, 2
        %s481 = scalar_lea.vmem [#allocation13], %s480
        // Predicated region
        $region61: #{tpu_custom_call.1} parent=43 // pred_check
          %p482 = pneg %p182
        $region62: #{tpu_custom_call.1} parent=43 // pred_check_branch
          %484 = sbr.rel (%p482) target = $region64
        $region63: #{tpu_custom_call.1} parent=43 // pred_region
          %486 = dma.done %s478, 32
        $region64: #{tpu_custom_call.1} parent=43 // pred_fallthru
          _
        %s487 = sand.u32 %s65, 1
        %s488 = scalar_lea.sflag [#allocation6], %s487
        %s489 = sand.u32 %s65, 1
        %s490 = smul.addr %s489, 16
        %s491 = scalar_lea.vmem [#allocation5], %s490
        %p492 = pneg %p78
        %p493 = pneg %p75
        %s494 = sand.u32 %s35, 1
        %s495 = scalar_lea.sflag [#allocation9], %s494
        %s496 = sand.u32 %s91, 1
        %s497 = smul.addr %s496, 32
        %s498 = scalar_lea.vmem [#allocation8], %s497
        %p499 = pneg %p104
        %p500 = pneg %p101
        %s501 = sand.u32 %s35, 1
        %s502 = scalar_lea.sflag [#allocation9], %s501
        %s503 = sand.u32 %s117, 1
        %s504 = smul.addr %s503, 32
        %s505 = scalar_lea.vmem [#allocation10], %s504
        %p506 = pneg %p130
        %p507 = pneg %p127
        %s508 = sand.u32 %s35, 1
        %s509 = scalar_lea.sflag [#allocation12], %s508
        %s510 = sand.u32 %s143, 1
        %s511 = scalar_lea.vmem [#allocation11], %s510
        %p512 = pneg %p156
        %p513 = pneg %p153
        %s514 = sand.u32 %s35, 1
        %s515 = scalar_lea.sflag [#allocation12], %s514
        %s516 = sand.u32 %s169, 1
        %s517 = smul.addr %s516, 2
        %s518 = scalar_lea.vmem [#allocation13], %s517
        %p519 = pneg %p182
        %p520 = pneg %p179
        %p521 = scmp.lt.s32.totalorder %s39, 1
        %s522 = scalar_select %p521, %s39, 1
        %s523 = smul.addr %s522, 2
        %s524 = scalar_lea.vmem %s5, %s523
        %p525 = pneg %p208
        %p526 = pneg %p205
        %p527 = pneg %p246
        %p528 = pneg %p243
        %s529 = sand.u32 %s233, 1
        %s530 = scalar_lea.sflag [#allocation7], %s529
        %s531 = sand.u32 %s233, 1
        %s532 = smul.addr %s531, 16
        %s533 = scalar_lea.vmem [#allocation14], %s532
        %p534 = pneg %p272
        %p535 = pneg %p269
        %s536 = sand.u32 %s35, 1
        %s537 = scalar_lea.sflag [#allocation16], %s536
        %s538 = sand.u32 %s259, 1
        %s539 = smul.addr %s538, 2
        %s540 = scalar_lea.vmem [#allocation15], %s539
        %p541 = pneg %p298
        %p542 = pneg %p295
        %s543 = sand.u32 %s35, 1
        %s544 = scalar_lea.sflag [#allocation16], %s543
        %s545 = sand.u32 %s285, 1
        %s546 = smul.addr %s545, 2
        %s547 = scalar_lea.vmem [#allocation17], %s546
        %s548 = ssub.s32 1, %s39
        %s549 = smul.u32 %s40, %s548
        %s550 = ssub.s32 0, %s40
        %s551 = smul.u32 %s550, %s39
        %s552 = sadd.s32 %s549, %s551
        %s553 = smul.u32 2, %s552
        %p554 = scmp.lt.s32.totalorder %s39, 1
        %s555 = scalar_select %p554, %s39, 1
        %s556 = smul.addr %s555, 2
        %s557 = scalar_lea.vmem %s5, %s556
        %s558 = ssub.s32 1, %s39
        %s559 = smul.u32 %s40, %s558
        %s560 = ssub.s32 0, %s40
        %s561 = smul.u32 %s560, %s39
        %s562 = sadd.s32 %s559, %s561
        %s563 = smul.u32 8, %s562
        %v564 = vld [vmem:[%s442] sm:$0xff]
        %v565 = vld [vmem:[%s442 + $0x8] sm:$0xff]
        %v566 = vld [vmem:[%s452] sm:$0xff]
        %v567 = vld [vmem:[%s452 + $0x8] sm:$0xff]
        %v568 = vld [vmem:[%s452 + $0x10] sm:$0xff]
        %v569 = vld [vmem:[%s452 + $0x18] sm:$0xff]
        %v570 = vld [vmem:[%s471] sm:$0x1]
        %v572 = vperm.slane %v570, 0
        %vm574 = vcmask 261120
        %v576 = vsel %vm574, %v564, 0
        %v579 = vsel %vm574, %v565, 0
        %581 = vmatpush.msra.mxu0 0.0
        %582 = vmatpush.msra.mxu0 0.0
        %583 = vmatpush.msra.mxu0 0.0
        %584 = vmatpush.msra.mxu0 0.0
        %585 = vmatpush.msra.mxu0 0.0
        %586 = vmatpush.msra.mxu0 0.0
        %587 = vmatpush.msra.mxu0 0.0
        %588 = vmatpush.msra.mxu0 0.0
        %589 = vmatpush.msra.mxu0 0.0
        %590 = vmatpush.msra.mxu0 0.0
        %591 = vmatpush.msra.mxu0 0.0
        %592 = vmatpush.msra.mxu0 0.0
        %593 = vmatpush.msra.mxu0 %v569
        %594 = vmatpush.msra.mxu0 %v568
        %595 = vmatpush.msra.mxu0 %v567
        %596 = vmatpush.msra.mxu0 %v566
        %597 = vmatmul.f32.gmra.mxu0 %v576
        %v598 = vpop.f32.mrf.mxu0
        %v599 = vadd.f32 %v572, %v598
        %600 = vmatmul.f32.gmra.mxu0 %v579
        %v601 = vpop.f32.mrf.mxu0
        %v602 = vadd.f32 %v572, %v601
        %603 = vdwg.mxu0
        %604 = vst [vmem:[#allocation4] sm:$0x3] %v599
        %s605 = scalar_lea.vmem [#allocation4], 2
        %606 = vst [vmem:[%s605 - $0x2] sm:$0xc] %v599
        %s607 = scalar_lea.vmem [#allocation4], 4
        %608 = vst [vmem:[%s607 - $0x4] sm:$0x30] %v599
        %s609 = scalar_lea.vmem [#allocation4], 6
        %610 = vst [vmem:[%s609 - $0x6] sm:$0xc0] %v599
        %s611 = scalar_lea.vmem [#allocation4], 8
        %612 = vst [vmem:[%s611] sm:$0x3] %v602
        %s613 = scalar_lea.vmem [#allocation4], 10
        %614 = vst [vmem:[%s613 - $0x2] sm:$0xc] %v602
        %s615 = scalar_lea.vmem [#allocation4], 12
        %616 = vst [vmem:[%s615 - $0x4] sm:$0x30] %v602
        %s617 = scalar_lea.vmem [#allocation4], 14
        %618 = vst [vmem:[%s617 - $0x6] sm:$0xc0] %v602
        %p619 = scmp.eq.s32.totalorder %s40, 0
        // Predicated region
        $region65: #{tpu_custom_call.1} parent=43 // pred_check
          %p620 = pneg %p619
        $region66: #{tpu_custom_call.1} parent=43 // pred_check_branch
          %622 = sbr.rel (%p620) target = $region68
        $region67: #{tpu_custom_call.1} parent=43 // pred_region
          %v623 = vld [vmem:[%s481] sm:$0x3]
          %s624 = smul.u32 %s39, 2
          %s625 = scalar_lea.vmem [#allocation2], %s624
          %vm626 = vcmask 254976
          %627 = vst.msk [vmem:[%s625] sm:$0x3] %vm626, %v623
          %v628 = vld [vmem:[%s557] sm:$0x3]
          %s629 = scalar_lea.vmem [#allocation3], %s624
          %630 = vst.msk [vmem:[%s629] sm:$0x3] %vm626, %v628
        $region68: #{tpu_custom_call.1} parent=43 // pred_fallthru
          _
        %v631 = vld [vmem:[%s462] sm:$0xff]
        %v632 = vld [vmem:[%s462 + $0x8] sm:$0xff]
        %v633 = vld [vmem:[%s462 + $0x10] sm:$0xff]
        %v634 = vld [vmem:[%s462 + $0x18] sm:$0xff]
        %s635 = smul.u32 %s39, 2
        %s636 = scalar_lea.vmem [#allocation2], %s635
        %v637 = vld [vmem:[%s636] sm:$0x3]
        %s638 = scalar_lea.vmem [#allocation3], %s635
        %v639 = vld [vmem:[%s638] sm:$0x3]
        %p640 = scmp.eq.s32.totalorder %s39, 0
        %s641 = scalar_select %p640, 0, 7
        %s642 = smul.u32 %s641, 2
        %s643 = scalar_lea.vmem [#allocation4], %s642
        %v644 = vld [vmem:[%s643] sm:$0x3]
        %v646 = vsel %vm574, %v637, 0
        %648 = vmatpush.msra.mxu0 0.0
        %649 = vmatpush.msra.mxu0 0.0
        %650 = vmatpush.msra.mxu0 0.0
        %651 = vmatpush.msra.mxu0 0.0
        %652 = vmatpush.msra.mxu0 0.0
        %653 = vmatpush.msra.mxu0 0.0
        %654 = vmatpush.msra.mxu0 0.0
        %655 = vmatpush.msra.mxu0 0.0
        %656 = vmatpush.msra.mxu0 0.0
        %657 = vmatpush.msra.mxu0 0.0
        %658 = vmatpush.msra.mxu0 0.0
        %659 = vmatpush.msra.mxu0 0.0
        %660 = vmatpush.msra.mxu0 %v634
        %661 = vmatpush.msra.mxu0 %v633
        %662 = vmatpush.msra.mxu0 %v632
        %663 = vmatpush.msra.mxu0 %v631
        %664 = vmatmul.f32.gmra.mxu0 %v646
        %v665 = vpop.f32.mrf.mxu0
        %v666 = vadd.f32 0.0, %v665
        %667 = vdwg.mxu0
        %v668 = vadd.f32 %v644, %v666
        %v669 = vxor.u32 %v668, 2147483648
        %v670 = vmul.f32 %v669, 1.442695
        %v671 = vpow.pop %v670
        %v672 = vadd.f32 %v671, 1.0
        %v673 = vrcp.pop %v672
        %v674 = vmul.f32 %v672, %v673
        %v675 = vsub.f32 1.0, %v674
        %v676 = vmul.f32 %v673, %v675
        %v677 = vadd.f32 %v673, %v676
        %vm678 = vweird.f32 %v672
        %vm679 = vweird.f32 %v673
        %vm680 = vmor %vm678, %vm679
        %v681 = vsel %vm680, %v673, %v677
        %v682 = vand.u32 2147483647, %v672
        %vm683 = vcmp.eq.f32.partialorder %v682, 8.507059e+37
        %v684 = vand.u32 %v672, 2147483648
        %v685 = vor.u32 1.1754944e-38, %v684
        %v686 = vsel %vm683, %v685, %v681
        %v687 = vmul.f32 1.0, %v686
        %v688 = vtanh.pop %v668
        %690 = vrot.lane.b32.xlu0 %v639, 32
        %v691 = vpop.permute.xlu0 %690
        %v693 = vmul.f32 %v687, %v691
        %695 = vrot.lane.b32.xlu0 %v688, 64
        %v696 = vpop.permute.xlu0 %695
        %v698 = vmul.f32 %v687, %v696
        %700 = vrot.lane.b32.xlu0 %v698, 32
        %v701 = vpop.permute.xlu0 %700
        %v703 = vadd.f32 %v693, %v701
        %v704 = vtanh.pop %v703
        %706 = vrot.lane.b32.xlu0 %v704, 64
        %v707 = vpop.permute.xlu0 %706
        %v709 = vmul.f32 %v687, %v707
        %711 = vrot.lane.b32.xlu0 %v709, 32
        %v712 = vpop.permute.xlu0 %711
        %s714 = scalar_lea.vmem %s533, %s642 [#allocation14]
        %vm715 = vcmask 254976
        %716 = vst.msk [vmem:[%s714] sm:$0x3] %vm715, %v712
        %s717 = scalar_select %p640, 1, 6
        %s718 = smul.u32 %s717, 2
        %s719 = scalar_lea.vmem [#allocation4], %s718
        %v720 = vld [vmem:[%s719] sm:$0x3]
        %v721 = vsel %vm574, %v712, 0
        %723 = vmatpush.msra.mxu0 0.0
        %724 = vmatpush.msra.mxu0 0.0
        %725 = vmatpush.msra.mxu0 0.0
        %726 = vmatpush.msra.mxu0 0.0
        %727 = vmatpush.msra.mxu0 0.0
        %728 = vmatpush.msra.mxu0 0.0
        %729 = vmatpush.msra.mxu0 0.0
        %730 = vmatpush.msra.mxu0 0.0
        %731 = vmatpush.msra.mxu0 0.0
        %732 = vmatpush.msra.mxu0 0.0
        %733 = vmatpush.msra.mxu0 0.0
        %734 = vmatpush.msra.mxu0 0.0
        %735 = vmatpush.msra.mxu0 %v634
        %736 = vmatpush.msra.mxu0 %v633
        %737 = vmatpush.msra.mxu0 %v632
        %738 = vmatpush.msra.mxu0 %v631
        %739 = vmatmul.f32.gmra.mxu0 %v721
        %v740 = vpop.f32.mrf.mxu0
        %v741 = vadd.f32 0.0, %v740
        %742 = vdwg.mxu0
        %v743 = vadd.f32 %v720, %v741
        %v744 = vxor.u32 %v743, 2147483648
        %v745 = vmul.f32 %v744, 1.442695
        %v746 = vpow.pop %v745
        %v747 = vadd.f32 %v746, 1.0
        %v748 = vrcp.pop %v747
        %v749 = vmul.f32 %v747, %v748
        %v750 = vsub.f32 1.0, %v749
        %v751 = vmul.f32 %v748, %v750
        %v752 = vadd.f32 %v748, %v751
        %vm753 = vweird.f32 %v747
        %vm754 = vweird.f32 %v748
        %vm755 = vmor %vm753, %vm754
        %v756 = vsel %vm755, %v748, %v752
        %v757 = vand.u32 2147483647, %v747
        %vm758 = vcmp.eq.f32.partialorder %v757, 8.507059e+37
        %v759 = vand.u32 %v747, 2147483648
        %v760 = vor.u32 1.1754944e-38, %v759
        %v761 = vsel %vm758, %v760, %v756
        %v762 = vmul.f32 1.0, %v761
        %v763 = vtanh.pop %v743
        %v764 = vmul.f32 %v762, %v703
        %766 = vrot.lane.b32.xlu0 %v763, 64
        %v767 = vpop.permute.xlu0 %766
        %v769 = vmul.f32 %v762, %v767
        %771 = vrot.lane.b32.xlu0 %v769, 32
        %v772 = vpop.permute.xlu0 %771
        %v774 = vadd.f32 %v764, %v772
        %v775 = vtanh.pop %v774
        %777 = vrot.lane.b32.xlu0 %v775, 64
        %v778 = vpop.permute.xlu0 %777
        %v780 = vmul.f32 %v762, %v778
        %782 = vrot.lane.b32.xlu0 %v780, 32
        %v783 = vpop.permute.xlu0 %782
        %s785 = scalar_lea.vmem %s533, %s718 [#allocation14]
        %786 = vst.msk [vmem:[%s785] sm:$0x3] %vm715, %v783
        %s787 = scalar_select %p640, 2, 5
        %s788 = smul.u32 %s787, 2
        %s789 = scalar_lea.vmem [#allocation4], %s788
        %v790 = vld [vmem:[%s789] sm:$0x3]
        %v791 = vsel %vm574, %v783, 0
        %793 = vmatpush.msra.mxu0 0.0
        %794 = vmatpush.msra.mxu0 0.0
        %795 = vmatpush.msra.mxu0 0.0
        %796 = vmatpush.msra.mxu0 0.0
        %797 = vmatpush.msra.mxu0 0.0
        %798 = vmatpush.msra.mxu0 0.0
        %799 = vmatpush.msra.mxu0 0.0
        %800 = vmatpush.msra.mxu0 0.0
        %801 = vmatpush.msra.mxu0 0.0
        %802 = vmatpush.msra.mxu0 0.0
        %803 = vmatpush.msra.mxu0 0.0
        %804 = vmatpush.msra.mxu0 0.0
        %805 = vmatpush.msra.mxu0 %v634
        %806 = vmatpush.msra.mxu0 %v633
        %807 = vmatpush.msra.mxu0 %v632
        %808 = vmatpush.msra.mxu0 %v631
        %809 = vmatmul.f32.gmra.mxu0 %v791
        %v810 = vpop.f32.mrf.mxu0
        %v811 = vadd.f32 0.0, %v810
        %812 = vdwg.mxu0
        %v813 = vadd.f32 %v790, %v811
        %v814 = vxor.u32 %v813, 2147483648
        %v815 = vmul.f32 %v814, 1.442695
        %v816 = vpow.pop %v815
        %v817 = vadd.f32 %v816, 1.0
        %v818 = vrcp.pop %v817
        %v819 = vmul.f32 %v817, %v818
        %v820 = vsub.f32 1.0, %v819
        %v821 = vmul.f32 %v818, %v820
        %v822 = vadd.f32 %v818, %v821
        %vm823 = vweird.f32 %v817
        %vm824 = vweird.f32 %v818
        %vm825 = vmor %vm823, %vm824
        %v826 = vsel %vm825, %v818, %v822
        %v827 = vand.u32 2147483647, %v817
        %vm828 = vcmp.eq.f32.partialorder %v827, 8.507059e+37
        %v829 = vand.u32 %v817, 2147483648
        %v830 = vor.u32 1.1754944e-38, %v829
        %v831 = vsel %vm828, %v830, %v826
        %v832 = vmul.f32 1.0, %v831
        %v833 = vtanh.pop %v813
        %v834 = vmul.f32 %v832, %v774
        %836 = vrot.lane.b32.xlu0 %v833, 64
        %v837 = vpop.permute.xlu0 %836
        %v839 = vmul.f32 %v832, %v837
        %841 = vrot.lane.b32.xlu0 %v839, 32
        %v842 = vpop.permute.xlu0 %841
        %v844 = vadd.f32 %v834, %v842
        %v845 = vtanh.pop %v844
        %847 = vrot.lane.b32.xlu0 %v845, 64
        %v848 = vpop.permute.xlu0 %847
        %v850 = vmul.f32 %v832, %v848
        %852 = vrot.lane.b32.xlu0 %v850, 32
        %v853 = vpop.permute.xlu0 %852
        %s855 = scalar_lea.vmem %s533, %s788 [#allocation14]
        %856 = vst.msk [vmem:[%s855] sm:$0x3] %vm715, %v853
        %s857 = scalar_select %p640, 3, 4
        %s858 = smul.u32 %s857, 2
        %s859 = scalar_lea.vmem [#allocation4], %s858
        %v860 = vld [vmem:[%s859] sm:$0x3]
        %v861 = vsel %vm574, %v853, 0
        %863 = vmatpush.msra.mxu0 0.0
        %864 = vmatpush.msra.mxu0 0.0
        %865 = vmatpush.msra.mxu0 0.0
        %866 = vmatpush.msra.mxu0 0.0
        %867 = vmatpush.msra.mxu0 0.0
        %868 = vmatpush.msra.mxu0 0.0
        %869 = vmatpush.msra.mxu0 0.0
        %870 = vmatpush.msra.mxu0 0.0
        %871 = vmatpush.msra.mxu0 0.0
        %872 = vmatpush.msra.mxu0 0.0
        %873 = vmatpush.msra.mxu0 0.0
        %874 = vmatpush.msra.mxu0 0.0
        %875 = vmatpush.msra.mxu0 %v634
        %876 = vmatpush.msra.mxu0 %v633
        %877 = vmatpush.msra.mxu0 %v632
        %878 = vmatpush.msra.mxu0 %v631
        %879 = vmatmul.f32.gmra.mxu0 %v861
        %v880 = vpop.f32.mrf.mxu0
        %v881 = vadd.f32 0.0, %v880
        %882 = vdwg.mxu0
        %v883 = vadd.f32 %v860, %v881
        %v884 = vxor.u32 %v883, 2147483648
        %v885 = vmul.f32 %v884, 1.442695
        %v886 = vpow.pop %v885
        %v887 = vadd.f32 %v886, 1.0
        %v888 = vrcp.pop %v887
        %v889 = vmul.f32 %v887, %v888
        %v890 = vsub.f32 1.0, %v889
        %v891 = vmul.f32 %v888, %v890
        %v892 = vadd.f32 %v888, %v891
        %vm893 = vweird.f32 %v887
        %vm894 = vweird.f32 %v888
        %vm895 = vmor %vm893, %vm894
        %v896 = vsel %vm895, %v888, %v892
        %v897 = vand.u32 2147483647, %v887
        %vm898 = vcmp.eq.f32.partialorder %v897, 8.507059e+37
        %v899 = vand.u32 %v887, 2147483648
        %v900 = vor.u32 1.1754944e-38, %v899
        %v901 = vsel %vm898, %v900, %v896
        %v902 = vmul.f32 1.0, %v901
        %v903 = vtanh.pop %v883
        %v904 = vmul.f32 %v902, %v844
        %906 = vrot.lane.b32.xlu0 %v903, 64
        %v907 = vpop.permute.xlu0 %906
        %v909 = vmul.f32 %v902, %v907
        %911 = vrot.lane.b32.xlu0 %v909, 32
        %v912 = vpop.permute.xlu0 %911
        %v914 = vadd.f32 %v904, %v912
        %v915 = vtanh.pop %v914
        %917 = vrot.lane.b32.xlu0 %v915, 64
        %v918 = vpop.permute.xlu0 %917
        %v920 = vmul.f32 %v902, %v918
        %922 = vrot.lane.b32.xlu0 %v920, 32
        %v923 = vpop.permute.xlu0 %922
        %s925 = scalar_lea.vmem %s533, %s858 [#allocation14]
        %926 = vst.msk [vmem:[%s925] sm:$0x3] %vm715, %v923
        %s927 = scalar_select %p640, 4, 3
        %s928 = smul.u32 %s927, 2
        %s929 = scalar_lea.vmem [#allocation4], %s928
        %v930 = vld [vmem:[%s929] sm:$0x3]
        %v931 = vsel %vm574, %v923, 0
        %933 = vmatpush.msra.mxu0 0.0
        %934 = vmatpush.msra.mxu0 0.0
        %935 = vmatpush.msra.mxu0 0.0
        %936 = vmatpush.msra.mxu0 0.0
        %937 = vmatpush.msra.mxu0 0.0
        %938 = vmatpush.msra.mxu0 0.0
        %939 = vmatpush.msra.mxu0 0.0
        %940 = vmatpush.msra.mxu0 0.0
        %941 = vmatpush.msra.mxu0 0.0
        %942 = vmatpush.msra.mxu0 0.0
        %943 = vmatpush.msra.mxu0 0.0
        %944 = vmatpush.msra.mxu0 0.0
        %945 = vmatpush.msra.mxu0 %v634
        %946 = vmatpush.msra.mxu0 %v633
        %947 = vmatpush.msra.mxu0 %v632
        %948 = vmatpush.msra.mxu0 %v631
        %949 = vmatmul.f32.gmra.mxu0 %v931
        %v950 = vpop.f32.mrf.mxu0
        %v951 = vadd.f32 0.0, %v950
        %952 = vdwg.mxu0
        %v953 = vadd.f32 %v930, %v951
        %v954 = vxor.u32 %v953, 2147483648
        %v955 = vmul.f32 %v954, 1.442695
        %v956 = vpow.pop %v955
        %v957 = vadd.f32 %v956, 1.0
        %v958 = vrcp.pop %v957
        %v959 = vmul.f32 %v957, %v958
        %v960 = vsub.f32 1.0, %v959
        %v961 = vmul.f32 %v958, %v960
        %v962 = vadd.f32 %v958, %v961
        %vm963 = vweird.f32 %v957
        %vm964 = vweird.f32 %v958
        %vm965 = vmor %vm963, %vm964
        %v966 = vsel %vm965, %v958, %v962
        %v967 = vand.u32 2147483647, %v957
        %vm968 = vcmp.eq.f32.partialorder %v967, 8.507059e+37
        %v969 = vand.u32 %v957, 2147483648
        %v970 = vor.u32 1.1754944e-38, %v969
        %v971 = vsel %vm968, %v970, %v966
        %v972 = vmul.f32 1.0, %v971
        %v973 = vtanh.pop %v953
        %v974 = vmul.f32 %v972, %v914
        %976 = vrot.lane.b32.xlu0 %v973, 64
        %v977 = vpop.permute.xlu0 %976
        %v979 = vmul.f32 %v972, %v977
        %981 = vrot.lane.b32.xlu0 %v979, 32
        %v982 = vpop.permute.xlu0 %981
        %v984 = vadd.f32 %v974, %v982
        %v985 = vtanh.pop %v984
        %987 = vrot.lane.b32.xlu0 %v985, 64
        %v988 = vpop.permute.xlu0 %987
        %v990 = vmul.f32 %v972, %v988
        %992 = vrot.lane.b32.xlu0 %v990, 32
        %v993 = vpop.permute.xlu0 %992
        %s995 = scalar_lea.vmem %s533, %s928 [#allocation14]
        %996 = vst.msk [vmem:[%s995] sm:$0x3] %vm715, %v993
        %s997 = scalar_select %p640, 5, 2
        %s998 = smul.u32 %s997, 2
        %s999 = scalar_lea.vmem [#allocation4], %s998
        %v1000 = vld [vmem:[%s999] sm:$0x3]
        %v1001 = vsel %vm574, %v993, 0
        %1003 = vmatpush.msra.mxu0 0.0
        %1004 = vmatpush.msra.mxu0 0.0
        %1005 = vmatpush.msra.mxu0 0.0
        %1006 = vmatpush.msra.mxu0 0.0
        %1007 = vmatpush.msra.mxu0 0.0
        %1008 = vmatpush.msra.mxu0 0.0
        %1009 = vmatpush.msra.mxu0 0.0
        %1010 = vmatpush.msra.mxu0 0.0
        %1011 = vmatpush.msra.mxu0 0.0
        %1012 = vmatpush.msra.mxu0 0.0
        %1013 = vmatpush.msra.mxu0 0.0
        %1014 = vmatpush.msra.mxu0 0.0
        %1015 = vmatpush.msra.mxu0 %v634
        %1016 = vmatpush.msra.mxu0 %v633
        %1017 = vmatpush.msra.mxu0 %v632
        %1018 = vmatpush.msra.mxu0 %v631
        %1019 = vmatmul.f32.gmra.mxu0 %v1001
        %v1020 = vpop.f32.mrf.mxu0
        %v1021 = vadd.f32 0.0, %v1020
        %1022 = vdwg.mxu0
        %v1023 = vadd.f32 %v1000, %v1021
        %v1024 = vxor.u32 %v1023, 2147483648
        %v1025 = vmul.f32 %v1024, 1.442695
        %v1026 = vpow.pop %v1025
        %v1027 = vadd.f32 %v1026, 1.0
        %v1028 = vrcp.pop %v1027
        %v1029 = vmul.f32 %v1027, %v1028
        %v1030 = vsub.f32 1.0, %v1029
        %v1031 = vmul.f32 %v1028, %v1030
        %v1032 = vadd.f32 %v1028, %v1031
        %vm1033 = vweird.f32 %v1027
        %vm1034 = vweird.f32 %v1028
        %vm1035 = vmor %vm1033, %vm1034
        %v1036 = vsel %vm1035, %v1028, %v1032
        %v1037 = vand.u32 2147483647, %v1027
        %vm1038 = vcmp.eq.f32.partialorder %v1037, 8.507059e+37
        %v1039 = vand.u32 %v1027, 2147483648
        %v1040 = vor.u32 1.1754944e-38, %v1039
        %v1041 = vsel %vm1038, %v1040, %v1036
        %v1042 = vmul.f32 1.0, %v1041
        %v1043 = vtanh.pop %v1023
        %v1044 = vmul.f32 %v1042, %v984
        %1046 = vrot.lane.b32.xlu0 %v1043, 64
        %v1047 = vpop.permute.xlu0 %1046
        %v1049 = vmul.f32 %v1042, %v1047
        %1051 = vrot.lane.b32.xlu0 %v1049, 32
        %v1052 = vpop.permute.xlu0 %1051
        %v1054 = vadd.f32 %v1044, %v1052
        %v1055 = vtanh.pop %v1054
        %1057 = vrot.lane.b32.xlu0 %v1055, 64
        %v1058 = vpop.permute.xlu0 %1057
        %v1060 = vmul.f32 %v1042, %v1058
        %1062 = vrot.lane.b32.xlu0 %v1060, 32
        %v1063 = vpop.permute.xlu0 %1062
        %s1065 = scalar_lea.vmem %s533, %s998 [#allocation14]
        %1066 = vst.msk [vmem:[%s1065] sm:$0x3] %vm715, %v1063
        %s1067 = scalar_select %p640, 6, 1
        %s1068 = smul.u32 %s1067, 2
        %s1069 = scalar_lea.vmem [#allocation4], %s1068
        %v1070 = vld [vmem:[%s1069] sm:$0x3]
        %v1071 = vsel %vm574, %v1063, 0
        %1073 = vmatpush.msra.mxu0 0.0
        %1074 = vmatpush.msra.mxu0 0.0
        %1075 = vmatpush.msra.mxu0 0.0
        %1076 = vmatpush.msra.mxu0 0.0
        %1077 = vmatpush.msra.mxu0 0.0
        %1078 = vmatpush.msra.mxu0 0.0
        %1079 = vmatpush.msra.mxu0 0.0
        %1080 = vmatpush.msra.mxu0 0.0
        %1081 = vmatpush.msra.mxu0 0.0
        %1082 = vmatpush.msra.mxu0 0.0
        %1083 = vmatpush.msra.mxu0 0.0
        %1084 = vmatpush.msra.mxu0 0.0
        %1085 = vmatpush.msra.mxu0 %v634
        %1086 = vmatpush.msra.mxu0 %v633
        %1087 = vmatpush.msra.mxu0 %v632
        %1088 = vmatpush.msra.mxu0 %v631
        %1089 = vmatmul.f32.gmra.mxu0 %v1071
        %v1090 = vpop.f32.mrf.mxu0
        %v1091 = vadd.f32 0.0, %v1090
        %1092 = vdwg.mxu0
        %v1093 = vadd.f32 %v1070, %v1091
        %v1094 = vxor.u32 %v1093, 2147483648
        %v1095 = vmul.f32 %v1094, 1.442695
        %v1096 = vpow.pop %v1095
        %v1097 = vadd.f32 %v1096, 1.0
        %v1098 = vrcp.pop %v1097
        %v1099 = vmul.f32 %v1097, %v1098
        %v1100 = vsub.f32 1.0, %v1099
        %v1101 = vmul.f32 %v1098, %v1100
        %v1102 = vadd.f32 %v1098, %v1101
        %vm1103 = vweird.f32 %v1097
        %vm1104 = vweird.f32 %v1098
        %vm1105 = vmor %vm1103, %vm1104
        %v1106 = vsel %vm1105, %v1098, %v1102
        %v1107 = vand.u32 2147483647, %v1097
        %vm1108 = vcmp.eq.f32.partialorder %v1107, 8.507059e+37
        %v1109 = vand.u32 %v1097, 2147483648
        %v1110 = vor.u32 1.1754944e-38, %v1109
        %v1111 = vsel %vm1108, %v1110, %v1106
        %v1112 = vmul.f32 1.0, %v1111
        %v1113 = vtanh.pop %v1093
        %v1114 = vmul.f32 %v1112, %v1054
        %1116 = vrot.lane.b32.xlu0 %v1113, 64
        %v1117 = vpop.permute.xlu0 %1116
        %v1119 = vmul.f32 %v1112, %v1117
        %1121 = vrot.lane.b32.xlu0 %v1119, 32
        %v1122 = vpop.permute.xlu0 %1121
        %v1124 = vadd.f32 %v1114, %v1122
        %v1125 = vtanh.pop %v1124
        %1127 = vrot.lane.b32.xlu0 %v1125, 64
        %v1128 = vpop.permute.xlu0 %1127
        %v1130 = vmul.f32 %v1112, %v1128
        %1132 = vrot.lane.b32.xlu0 %v1130, 32
        %v1133 = vpop.permute.xlu0 %1132
        %s1135 = scalar_lea.vmem %s533, %s1068 [#allocation14]
        %1136 = vst.msk [vmem:[%s1135] sm:$0x3] %vm715, %v1133
        %s1137 = scalar_select %p640, 7, 0
        %s1138 = smul.u32 %s1137, 2
        %s1139 = scalar_lea.vmem [#allocation4], %s1138
        %v1140 = vld [vmem:[%s1139] sm:$0x3]
        %v1141 = vsel %vm574, %v1133, 0
        %1143 = vmatpush.msra.mxu0 0.0
        %1144 = vmatpush.msra.mxu0 0.0
        %1145 = vmatpush.msra.mxu0 0.0
        %1146 = vmatpush.msra.mxu0 0.0
        %1147 = vmatpush.msra.mxu0 0.0
        %1148 = vmatpush.msra.mxu0 0.0
        %1149 = vmatpush.msra.mxu0 0.0
        %1150 = vmatpush.msra.mxu0 0.0
        %1151 = vmatpush.msra.mxu0 0.0
        %1152 = vmatpush.msra.mxu0 0.0
        %1153 = vmatpush.msra.mxu0 0.0
        %1154 = vmatpush.msra.mxu0 0.0
        %1155 = vmatpush.msra.mxu0 %v634
        %1156 = vmatpush.msra.mxu0 %v633
        %1157 = vmatpush.msra.mxu0 %v632
        %1158 = vmatpush.msra.mxu0 %v631
        %1159 = vmatmul.f32.gmra.mxu0 %v1141
        %v1160 = vpop.f32.mrf.mxu0
        %v1161 = vadd.f32 0.0, %v1160
        %1162 = vdwg.mxu0
        %v1163 = vadd.f32 %v1140, %v1161
        %v1164 = vxor.u32 %v1163, 2147483648
        %v1165 = vmul.f32 %v1164, 1.442695
        %v1166 = vpow.pop %v1165
        %v1167 = vadd.f32 %v1166, 1.0
        %v1168 = vrcp.pop %v1167
        %v1169 = vmul.f32 %v1167, %v1168
        %v1170 = vsub.f32 1.0, %v1169
        %v1171 = vmul.f32 %v1168, %v1170
        %v1172 = vadd.f32 %v1168, %v1171
        %vm1173 = vweird.f32 %v1167
        %vm1174 = vweird.f32 %v1168
        %vm1175 = vmor %vm1173, %vm1174
        %v1176 = vsel %vm1175, %v1168, %v1172
        %v1177 = vand.u32 2147483647, %v1167
        %vm1178 = vcmp.eq.f32.partialorder %v1177, 8.507059e+37
        %v1179 = vand.u32 %v1167, 2147483648
        %v1180 = vor.u32 1.1754944e-38, %v1179
        %v1181 = vsel %vm1178, %v1180, %v1176
        %v1182 = vmul.f32 1.0, %v1181
        %v1183 = vtanh.pop %v1163
        %v1184 = vmul.f32 %v1182, %v1124
        %1186 = vrot.lane.b32.xlu0 %v1183, 64
        %v1187 = vpop.permute.xlu0 %1186
        %v1189 = vmul.f32 %v1182, %v1187
        %1191 = vrot.lane.b32.xlu0 %v1189, 32
        %v1192 = vpop.permute.xlu0 %1191
        %v1194 = vadd.f32 %v1184, %v1192
        %v1195 = vtanh.pop %v1194
        %1197 = vrot.lane.b32.xlu0 %v1195, 64
        %v1198 = vpop.permute.xlu0 %1197
        %v1200 = vmul.f32 %v1182, %v1198
        %1202 = vrot.lane.b32.xlu0 %v1200, 32
        %v1203 = vpop.permute.xlu0 %1202
        %s1205 = scalar_lea.vmem %s533, %s1138 [#allocation14]
        %1206 = vst.msk [vmem:[%s1205] sm:$0x3] %vm715, %v1203
        %1207 = vst.msk [vmem:[%s636] sm:$0x3] %vm715, %v1203
        %1209 = vrot.lane.b32.xlu0 %v1194, 96
        %v1210 = vpop.permute.xlu0 %1209
        %1212 = vst.msk [vmem:[%s638] sm:$0x3] %vm715, %v1210
        // Predicated region
        $region69: #{tpu_custom_call.1} parent=43 // pred_check
          %p1213 = pneg %p619
        $region70: #{tpu_custom_call.1} parent=43 // pred_check_branch
          %1215 = sbr.rel (%p1213) target = $region72
        $region71: #{tpu_custom_call.1} parent=43 // pred_region
          %1216 = vst.msk [vmem:[%s540] sm:$0x3] %vm715, %v1203
          %1217 = vst.msk [vmem:[%s547] sm:$0x3] %vm715, %v1210
        $region72: #{tpu_custom_call.1} parent=43 // pred_fallthru
          _
        %s1218 = sand.u32 %s233, 1
        %s1219 = scalar_lea.sflag [#allocation7], %s1218
        %s1220 = sand.u32 %s233, 1
        %s1221 = smul.addr %s1220, 16
        %s1222 = scalar_lea.vmem [#allocation14], %s1221
        %s1223 = sand.u32 %s35, 1
        %s1224 = scalar_lea.sflag [#allocation16], %s1223
        %s1225 = sand.u32 %s259, 1
        %s1226 = smul.addr %s1225, 2
        %s1227 = scalar_lea.vmem [#allocation15], %s1226
        %s1228 = sand.u32 %s35, 1
        %s1229 = scalar_lea.sflag [#allocation16], %s1228
        %s1230 = sand.u32 %s285, 1
        %s1231 = smul.addr %s1230, 2
        %s1232 = scalar_lea.vmem [#allocation17], %s1231
        // Predicated region
        $region73: #{tpu_custom_call.1} parent=43 // pred_check
          %p1233 = pneg %p243
        $region74: #{tpu_custom_call.1} parent=43 // pred_check_branch
          %1235 = sbr.rel (%p1233) target = $region76
        $region75: #{tpu_custom_call.1} parent=43 // pred_region
          %s1236 = ssub.s32 1, %s39
          %s1237 = smul.u32 %s40, %s1236
          %s1238 = ssub.s32 0, %s40
          %s1239 = smul.u32 %s1238, %s39
          %s1240 = sadd.s32 %s1237, %s1239
          %s1241 = smul.u32 8, %s1240
          %1243 = vsyncadd %s1219, 0
          %s1244 = smul.addr %s39, 8
          %s1245 = sadd.s32 %s1241, %s1244
          %s1246 = smul.addr %s1245, 2
          %s1247 = scalar_lea.hbm %s6, %s1246
          %s1248 = sshll.u32 %s1222, 4
          %s1249 = int_to_ptr.vmem [resolvable:$true] %s1248
          %s1250 = sshll.u32 %s1247, 4
          %s1251 = int_to_ptr.hbm [resolvable:$true] %s1250
          %1256 = dma.vmem_to_hbm [thread:$0]  %s1249, 256, %s1251, %s1219, 32, 32, 2
        $region76: #{tpu_custom_call.1} parent=43 // pred_fallthru
          _
        // Predicated region
        $region77: #{tpu_custom_call.1} parent=43 // pred_check
          %p1257 = pneg %p269
        $region78: #{tpu_custom_call.1} parent=43 // pred_check_branch
          %1259 = sbr.rel (%p1257) target = $region80
        $region79: #{tpu_custom_call.1} parent=43 // pred_region
          %1261 = vsyncadd %s1224, 0
          %s1262 = smul.addr %s39, 2
          %s1263 = scalar_lea.hbm %s7, %s1262
          %s1265 = sshll.u32 %s1227, 4
          %s1266 = int_to_ptr.vmem [resolvable:$true] %s1265
          %s1267 = sshll.u32 %s1263, 4
          %s1268 = int_to_ptr.hbm [resolvable:$true] %s1267
          %1270 = dma.vmem_to_hbm [thread:$0]  %s1266, 32, %s1268, %s1224
        $region80: #{tpu_custom_call.1} parent=43 // pred_fallthru
          _
        // Predicated region
        $region81: #{tpu_custom_call.1} parent=43 // pred_check
          %p1271 = pneg %p295
        $region82: #{tpu_custom_call.1} parent=43 // pred_check_branch
          %1273 = sbr.rel (%p1271) target = $region84
        $region83: #{tpu_custom_call.1} parent=43 // pred_region
          %1275 = vsyncadd %s1229, 0
          %s1276 = smul.addr %s39, 2
          %s1277 = scalar_lea.hbm %s8, %s1276
          %s1279 = sshll.u32 %s1232, 4
          %s1280 = int_to_ptr.vmem [resolvable:$true] %s1279
          %s1281 = sshll.u32 %s1277, 4
          %s1282 = int_to_ptr.hbm [resolvable:$true] %s1281
          %1284 = dma.vmem_to_hbm [thread:$0]  %s1280, 32, %s1282, %s1229
        $region84: #{tpu_custom_call.1} parent=43 // pred_fallthru
          _
      $region44: #{tpu_custom_call.1} parent=5 // pred_fallthru
        _
      %p1285 = scmp.le.s32.totalorder 2, %s30
      // Predicated region
      $region85: #{tpu_custom_call.1} parent=5 // pred_check
        %p1286 = pneg %p1285
      $region86: #{tpu_custom_call.1} parent=5 // pred_check_branch
        %1288 = sbr.rel (%p1286) target = $region88
      $region87: #{tpu_custom_call.1} parent=5 // pred_region
        %s1289 = ssub.s32 %s30, 2
        // Predicated region
        $region89: #{tpu_custom_call.1} parent=87 // pred_check
          %p1290 = pneg %p249
        $region90: #{tpu_custom_call.1} parent=87 // pred_check_branch
          %1292 = sbr.rel (%p1290) target = $region92
        $region91: #{tpu_custom_call.1} parent=87 // pred_region
          %s1293 = sand.u32 %s234, 1
          %s1294 = scalar_lea.sflag [#allocation7], %s1293
          %s1295 = sand.u32 %s234, 1
          %s1296 = smul.addr %s1295, 16
          %s1297 = scalar_lea.vmem [#allocation14], %s1296
          %1299 = dma.done %s1294, 256
        $region92: #{tpu_custom_call.1} parent=87 // pred_fallthru
          _
        // Predicated region
        $region93: #{tpu_custom_call.1} parent=87 // pred_check
          %p1300 = pneg %p275
        $region94: #{tpu_custom_call.1} parent=87 // pred_check_branch
          %1302 = sbr.rel (%p1300) target = $region96
        $region95: #{tpu_custom_call.1} parent=87 // pred_region
          %s1303 = sand.u32 %s36, 1
          %s1304 = scalar_lea.sflag [#allocation16], %s1303
          %s1305 = sand.u32 %s260, 1
          %s1306 = smul.addr %s1305, 2
          %s1307 = scalar_lea.vmem [#allocation15], %s1306
          %1309 = dma.done %s1304, 32
        $region96: #{tpu_custom_call.1} parent=87 // pred_fallthru
          _
        // Predicated region
        $region97: #{tpu_custom_call.1} parent=87 // pred_check
          %p1310 = pneg %p301
        $region98: #{tpu_custom_call.1} parent=87 // pred_check_branch
          %1312 = sbr.rel (%p1310) target = $region100
        $region99: #{tpu_custom_call.1} parent=87 // pred_region
          %s1313 = sand.u32 %s36, 1
          %s1314 = scalar_lea.sflag [#allocation16], %s1313
          %s1315 = sand.u32 %s286, 1
          %s1316 = smul.addr %s1315, 2
          %s1317 = scalar_lea.vmem [#allocation17], %s1316
          %1319 = dma.done %s1314, 32
        $region100: #{tpu_custom_call.1} parent=87 // pred_fallthru
          _
      $region88: #{tpu_custom_call.1} parent=5 // pred_fallthru
        _
    $region6: #{tpu_custom_call.1} parent=1 // loop_footer
      %s34 = sadd.s32 1, %s30
    $region7: #{tpu_custom_call.1} parent=1 // loop_footer_branch
      %29 = sbr.rel target = $region3
    $region8: #{tpu_custom_call.1} parent=1 // loop_exit
      _
    %1320 = vsyncpa [#allocation6], 1
    %s1321 = scalar_lea.sflag [#allocation6], 1
    %1322 = vsyncpa %s1321, 1
    %1323 = vsyncpa [#allocation9], 1
    %s1324 = scalar_lea.sflag [#allocation9], 1
    %1325 = vsyncpa %s1324, 1
    %1326 = vsyncpa [#allocation12], 1
    %s1327 = scalar_lea.sflag [#allocation12], 1
    %1328 = vsyncpa %s1327, 1
    %1329 = vsyncpa [#allocation7], 1
    %s1330 = scalar_lea.sflag [#allocation7], 1
    %1331 = vsyncpa %s1330, 1
    %1332 = vsyncpa [#allocation16], 1
    %s1333 = scalar_lea.sflag [#allocation16], 1
    %1334 = vsyncpa %s1333, 1

</llo_original>
